<compile_context>
chip_gen: v7x
topology: tpu7x:2x2x1
jax: 0.10.0
libtpu: 0.0.40
codegen_flags: <defaults>
</compile_context>

<pallas_src>
import functools
import math

import jax
import jax.numpy as jnp
from jax import lax
from jax.experimental import pallas as pl
from jax.experimental.pallas import tpu as pltpu


# ---------------------------------------------------------------------------
# Pallas kernel: conv as Kh*Kw accumulated matmuls over shifted flat views
# ---------------------------------------------------------------------------
def _dgconv_kernel(x_ref, w_ref, b_ref, o_ref, *, taps, cout, lout):
    # x_ref : (1, Cin, Lp)        padded image, spatial dims flattened on lanes
    # w_ref : (Kh*Kw, Cout, Cin)  pre-masked weight, one (Cout, Cin) mat per tap
    # b_ref : (Cout, 1)           fp32 bias
    # o_ref : (1, Cout, Lout)     "wide" stride-1 output (Ho1 rows x Wp cols)
    acc = jnp.zeros((cout, lout), dtype=jnp.float32)
    for r, off in enumerate(taps):              # static unroll over Kh*Kw taps
        xs = x_ref[0, :, pl.ds(off, lout)]      # (Cin, Lout) shifted flat view
        acc = acc + jnp.dot(w_ref[r], xs, preferred_element_type=jnp.float32)
    o_ref[0] = (acc + b_ref[...]).astype(o_ref.dtype)


# ---------------------------------------------------------------------------
# Glue: gate -> Kronecker mask U (faithful port of `aggregate`, sort=False)
# ---------------------------------------------------------------------------
def aggregate_U(sign_g, K):
    I2 = jnp.eye(2, dtype=jnp.float32)
    one2 = jnp.ones((2, 2), dtype=jnp.float32)
    gate_k = jnp.stack((sign_g, 1.0 - sign_g))              # (2, K)
    U = [gate_k[0, i] * one2 + gate_k[1, i] * I2 for i in range(K)]
    while len(U) != 1:
        temp = []
        for i in range(0, len(U) - 1, 2):
            temp.append(jnp.kron(U[i], U[i + 1]))
        if len(U) % 2 != 0:
            temp.append(U[-1])
        U = temp
    return U[0]                                             # (2**K, 2**K)


# ---------------------------------------------------------------------------
# DGConv2d forward (masked conv branch)
# ---------------------------------------------------------------------------
def dgconv2d_forward(x, weight, bias, gate, *, stride=1, padding=0, dilation=1,
                     compute_dtype=jnp.bfloat16):
    # x      : (N, Cin, H, W)        NCHW, like PyTorch
    # weight : (Cout, Cin, Kh, Kw)   OIHW, like PyTorch
    # bias   : (Cout,)
    # gate   : (K,) with K = log2(Cin); module requires Cout == Cin == 2**K
    Cout, Cin, Kh, Kw = weight.shape
    N, _, H, W = x.shape
    K = int(math.log2(Cin))

    # DcSign2 forward == sign (note: sign(0) == 0 -> 0.5 mask entry, exactly
    # like the PyTorch module; the eps-initialized gate never hits 0).
    sign_g = (jnp.sign(gate) + 1.0) * 0.5
    U = aggregate_U(sign_g, K)                               # (Cout, Cin)

    # Pre-apply the Kronecker gate to the weight ONCE, outside the kernel.
    mw = weight * U[:, :, None, None]                        # (Cout, Cin, Kh, Kw)
    wr = jnp.transpose(mw, (2, 3, 0, 1)).reshape(Kh * Kw, Cout, Cin)
    wr = wr.astype(compute_dtype)

    # Pad spatially once (plus extra zero rows so shifted flat views stay in
    # bounds), then flatten the spatial dims onto the lane axis (free reshape).
    Hp, Wp = H + 2 * padding, W + 2 * padding
    Ho1 = Hp - dilation * (Kh - 1)          # stride-1 output height
    Wo1 = Wp - dilation * (Kw - 1)          # stride-1 output width
    assert Ho1 >= 1 and Wo1 >= 1, "kernel does not fit inside the padded input"
    extra_h = -(-(dilation * (Kw - 1)) // Wp)   # usually 1 (0 if Kw == 1)
    xp = jnp.pad(x.astype(compute_dtype),
                 ((0, 0), (0, 0),
                  (padding, padding + extra_h), (padding, padding)))
    Lp = (Hp + extra_h) * Wp
    xflat = xp.reshape(N, Cin, Lp)

    Lout = Ho1 * Wp                          # wide stride-1 output, flat
    taps = tuple(kh * dilation * Wp + kw * dilation
                 for kh in range(Kh) for kw in range(Kw))
    assert taps[-1] + Lout <= Lp

    bias_col = bias.astype(jnp.float32).reshape(Cout, 1)

    # Explicit VMEM budget (double-buffered slab + resident weight + output).
    itm = jnp.dtype(compute_dtype).itemsize
    est = (2 * Cin * Lp * itm
           + 2 * Kh * Kw * Cout * Cin * itm
           + 2 * Cout * 4
           + 2 * Cout * Lout * 4
           + 2 * Cout * Lout * 4)
    vmem_limit = int(min(max(4 * est, 16 * 1024 * 1024), 48 * 1024 * 1024))

    out_wide = pl.pallas_call(
        functools.partial(_dgconv_kernel, taps=taps, cout=Cout, lout=Lout),
        out_shape=jax.ShapeDtypeStruct((N, Cout, Lout), jnp.float32),
        grid=(N,),
        in_specs=[
            pl.BlockSpec((1, Cin, Lp), lambda n: (n, 0, 0)),         # image slab
            pl.BlockSpec((Kh * Kw, Cout, Cin), lambda n: (0, 0, 0)),  # weights
            pl.BlockSpec((Cout, 1), lambda n: (0, 0)),                # bias
        ],
        out_specs=pl.BlockSpec((1, Cout, Lout), lambda n: (n, 0, 0)),
        compiler_params=pltpu.CompilerParams(
            dimension_semantics=("parallel",),
            vmem_limit_bytes=vmem_limit),
    )(xflat, wr, bias_col)

    # Wide output is already NCHW-ordered: free reshape + slice out the valid
    # columns; stride > 1 is handled by subsampling the stride-1 result.
    Ho = (Ho1 - 1) // stride + 1
    Wo = (Wo1 - 1) // stride + 1
    out = out_wide.reshape(N, Cout, Ho1, Wp)
    out = out[:, :, ::stride, ::stride][:, :, :Ho, :Wo]
    return out


# ---------------------------------------------------------------------------
# Reference (plain JAX) for a correctness check
# ---------------------------------------------------------------------------
def dgconv2d_reference(x, weight, bias, gate, *, stride=1, padding=0, dilation=1):
    Cout, Cin, Kh, Kw = weight.shape
    K = int(math.log2(Cin))
    sign_g = (jnp.sign(gate) + 1.0) / 2.0
    U = aggregate_U(sign_g, K)
    masked_w = weight * U[:, :, None, None]
    y = lax.conv_general_dilated(
        x, masked_w,
        window_strides=(stride, stride),
        padding=[(padding, padding), (padding, padding)],
        rhs_dilation=(dilation, dilation),
        dimension_numbers=("NCHW", "OIHW", "NCHW"))
    return y + bias[None, :, None, None]


if __name__ == "__main__":
    # Small shapes consistent with the module: Cin == Cout == 2**K
    N, Cin, H, W = 2, 16, 16, 16
    Cout, Kh, Kw = 16, 3, 3
    stride, padding, dilation = 1, 1, 1
    K = int(math.log2(Cin))

    key = jax.random.PRNGKey(0)
    kw_key, kb_key, kx_key = jax.random.split(key, 3)

    # Deterministic parameter init (Conv2d-style uniform bounds).
    fan_in = Cin * Kh * Kw
    bound = 1.0 / math.sqrt(fan_in)
    weight = jax.random.uniform(kw_key, (Cout, Cin, Kh, Kw), jnp.float32,
                                minval=-bound, maxval=bound)
    bias = jax.random.uniform(kb_key, (Cout,), jnp.float32,
                              minval=-bound, maxval=bound)
    # gate init: eps * (+-1) per entry, deterministic alternating pattern
    eps = 1e-8
    gate = eps * jnp.array([1.0 if i % 2 == 0 else -1.0 for i in range(K)],
                           dtype=jnp.float32)
    x = jax.random.normal(kx_key, (N, Cin, H, W), dtype=jnp.float32)

    y_ref = dgconv2d_reference(x, weight, bias, gate, stride=stride,
                               padding=padding, dilation=dilation)
    assert y_ref.shape == (N, Cout, H, W)

    # fp32 path: matches the PyTorch module's compute dtype.
    fwd_f32 = jax.jit(functools.partial(
        dgconv2d_forward, stride=stride, padding=padding, dilation=dilation,
        compute_dtype=jnp.float32))
    y32 = jax.block_until_ready(fwd_f32(x, weight, bias, gate))
    assert y32.shape == y_ref.shape
    assert jnp.allclose(y32, y_ref, atol=1e-4, rtol=1e-4)

    # bf16 fast path (fp32 accumulation), per perf review; looser tolerance.
    fwd_bf16 = jax.jit(functools.partial(
        dgconv2d_forward, stride=stride, padding=padding, dilation=dilation,
        compute_dtype=jnp.bfloat16))
    y16 = jax.block_until_ready(fwd_bf16(x, weight, bias, gate))
    assert y16.shape == y_ref.shape
    assert jnp.allclose(y16, y_ref, atol=5e-2, rtol=5e-2)

    print("KERNEL_OK")
</pallas_src>

<mosaic_0001>
module attributes {stable_mosaic.version = 11 : i64} {
  func.func @_dgconv_kernel(%arg0: i32, %arg1: memref<1x16x342xf32, #tpu.memory_space<vmem>>, %arg2: memref<9x16x16xf32, #tpu.memory_space<vmem>>, %arg3: memref<16x1xf32, #tpu.memory_space<vmem>>, %arg4: memref<1x16x288xf32, #tpu.memory_space<vmem>>) attributes {dimension_semantics = [#tpu.dimension_semantics<parallel>], iteration_bounds = array<i64: 2>, scalar_prefetch = 0 : i64, scratch_operands = 0 : i64, tpu.core_type = #tpu.core_type<tc>, window_params = [{transform_indices = @transform_0, window_bounds = array<i64: 1, 16, 342>}, {pipeline_mode = #tpu.pipeline_mode<synchronous>, transform_indices = @transform_1, window_bounds = array<i64: 9, 16, 16>}, {pipeline_mode = #tpu.pipeline_mode<synchronous>, transform_indices = @transform_2, window_bounds = array<i64: 16, 1>}, {transform_indices = @transform_3, window_bounds = array<i64: 1, 16, 288>}]} {
    %cst = arith.constant 0.000000e+00 : f32
    %0 = vector.broadcast %cst : f32 to vector<16x288xf32>
    %c0 = arith.constant 0 : index
    %c0_0 = arith.constant 0 : index
    %c0_1 = arith.constant 0 : index
    %1 = vector.load %arg1[%c0, %c0_0, %c0_1] : memref<1x16x342xf32, #tpu.memory_space<vmem>>, vector<1x16x288xf32>
    %2 = vector.shape_cast %1 : vector<1x16x288xf32> to vector<16x288xf32>
    %c0_2 = arith.constant 0 : index
    %c0_3 = arith.constant 0 : index
    %c0_4 = arith.constant 0 : index
    %3 = vector.load %arg2[%c0_2, %c0_3, %c0_4] : memref<9x16x16xf32, #tpu.memory_space<vmem>>, vector<1x16x16xf32>
    %4 = vector.shape_cast %3 : vector<1x16x16xf32> to vector<16x16xf32>
    %cst_5 = arith.constant dense<0.000000e+00> : vector<16x288xf32>
    %5 = tpu.matmul %4, %2, %cst_5 {dimension_numbers = #tpu.dot_dimension_numbers<[1], [0], [0], [1], [0, 0, 1, 1], [], []>} : vector<16x16xf32>, vector<16x288xf32>, vector<16x288xf32> -> vector<16x288xf32>
    %6 = arith.addf %0, %5 : vector<16x288xf32>
    %c0_6 = arith.constant 0 : index
    %c0_7 = arith.constant 0 : index
    %c1 = arith.constant 1 : index
    %7 = vector.load %arg1[%c0_6, %c0_7, %c1] : memref<1x16x342xf32, #tpu.memory_space<vmem>>, vector<1x16x288xf32>
    %8 = vector.shape_cast %7 : vector<1x16x288xf32> to vector<16x288xf32>
    %c1_8 = arith.constant 1 : index
    %c0_9 = arith.constant 0 : index
    %c0_10 = arith.constant 0 : index
    %9 = vector.load %arg2[%c1_8, %c0_9, %c0_10] : memref<9x16x16xf32, #tpu.memory_space<vmem>>, vector<1x16x16xf32>
    %10 = vector.shape_cast %9 : vector<1x16x16xf32> to vector<16x16xf32>
    %cst_11 = arith.constant dense<0.000000e+00> : vector<16x288xf32>
    %11 = tpu.matmul %10, %8, %cst_11 {dimension_numbers = #tpu.dot_dimension_numbers<[1], [0], [0], [1], [0, 0, 1, 1], [], []>} : vector<16x16xf32>, vector<16x288xf32>, vector<16x288xf32> -> vector<16x288xf32>
    %12 = arith.addf %6, %11 : vector<16x288xf32>
    %c0_12 = arith.constant 0 : index
    %c0_13 = arith.constant 0 : index
    %c2 = arith.constant 2 : index
    %13 = vector.load %arg1[%c0_12, %c0_13, %c2] : memref<1x16x342xf32, #tpu.memory_space<vmem>>, vector<1x16x288xf32>
    %14 = vector.shape_cast %13 : vector<1x16x288xf32> to vector<16x288xf32>
    %c2_14 = arith.constant 2 : index
    %c0_15 = arith.constant 0 : index
    %c0_16 = arith.constant 0 : index
    %15 = vector.load %arg2[%c2_14, %c0_15, %c0_16] : memref<9x16x16xf32, #tpu.memory_space<vmem>>, vector<1x16x16xf32>
    %16 = vector.shape_cast %15 : vector<1x16x16xf32> to vector<16x16xf32>
    %cst_17 = arith.constant dense<0.000000e+00> : vector<16x288xf32>
    %17 = tpu.matmul %16, %14, %cst_17 {dimension_numbers = #tpu.dot_dimension_numbers<[1], [0], [0], [1], [0, 0, 1, 1], [], []>} : vector<16x16xf32>, vector<16x288xf32>, vector<16x288xf32> -> vector<16x288xf32>
    %18 = arith.addf %12, %17 : vector<16x288xf32>
    %c0_18 = arith.constant 0 : index
    %c0_19 = arith.constant 0 : index
    %c18 = arith.constant 18 : index
    %19 = vector.load %arg1[%c0_18, %c0_19, %c18] : memref<1x16x342xf32, #tpu.memory_space<vmem>>, vector<1x16x288xf32>
    %20 = vector.shape_cast %19 : vector<1x16x288xf32> to vector<16x288xf32>
    %c3 = arith.constant 3 : index
    %c0_20 = arith.constant 0 : index
    %c0_21 = arith.constant 0 : index
    %21 = vector.load %arg2[%c3, %c0_20, %c0_21] : memref<9x16x16xf32, #tpu.memory_space<vmem>>, vector<1x16x16xf32>
    %22 = vector.shape_cast %21 : vector<1x16x16xf32> to vector<16x16xf32>
    %cst_22 = arith.constant dense<0.000000e+00> : vector<16x288xf32>
    %23 = tpu.matmul %22, %20, %cst_22 {dimension_numbers = #tpu.dot_dimension_numbers<[1], [0], [0], [1], [0, 0, 1, 1], [], []>} : vector<16x16xf32>, vector<16x288xf32>, vector<16x288xf32> -> vector<16x288xf32>
    %24 = arith.addf %18, %23 : vector<16x288xf32>
    %c0_23 = arith.constant 0 : index
    %c0_24 = arith.constant 0 : index
    %c19 = arith.constant 19 : index
    %25 = vector.load %arg1[%c0_23, %c0_24, %c19] : memref<1x16x342xf32, #tpu.memory_space<vmem>>, vector<1x16x288xf32>
    %26 = vector.shape_cast %25 : vector<1x16x288xf32> to vector<16x288xf32>
    %c4 = arith.constant 4 : index
    %c0_25 = arith.constant 0 : index
    %c0_26 = arith.constant 0 : index
    %27 = vector.load %arg2[%c4, %c0_25, %c0_26] : memref<9x16x16xf32, #tpu.memory_space<vmem>>, vector<1x16x16xf32>
    %28 = vector.shape_cast %27 : vector<1x16x16xf32> to vector<16x16xf32>
    %cst_27 = arith.constant dense<0.000000e+00> : vector<16x288xf32>
    %29 = tpu.matmul %28, %26, %cst_27 {dimension_numbers = #tpu.dot_dimension_numbers<[1], [0], [0], [1], [0, 0, 1, 1], [], []>} : vector<16x16xf32>, vector<16x288xf32>, vector<16x288xf32> -> vector<16x288xf32>
    %30 = arith.addf %24, %29 : vector<16x288xf32>
    %c0_28 = arith.constant 0 : index
    %c0_29 = arith.constant 0 : index
    %c20 = arith.constant 20 : index
    %31 = vector.load %arg1[%c0_28, %c0_29, %c20] : memref<1x16x342xf32, #tpu.memory_space<vmem>>, vector<1x16x288xf32>
    %32 = vector.shape_cast %31 : vector<1x16x288xf32> to vector<16x288xf32>
    %c5 = arith.constant 5 : index
    %c0_30 = arith.constant 0 : index
    %c0_31 = arith.constant 0 : index
    %33 = vector.load %arg2[%c5, %c0_30, %c0_31] : memref<9x16x16xf32, #tpu.memory_space<vmem>>, vector<1x16x16xf32>
    %34 = vector.shape_cast %33 : vector<1x16x16xf32> to vector<16x16xf32>
    %cst_32 = arith.constant dense<0.000000e+00> : vector<16x288xf32>
    %35 = tpu.matmul %34, %32, %cst_32 {dimension_numbers = #tpu.dot_dimension_numbers<[1], [0], [0], [1], [0, 0, 1, 1], [], []>} : vector<16x16xf32>, vector<16x288xf32>, vector<16x288xf32> -> vector<16x288xf32>
    %36 = arith.addf %30, %35 : vector<16x288xf32>
    %c0_33 = arith.constant 0 : index
    %c0_34 = arith.constant 0 : index
    %c36 = arith.constant 36 : index
    %37 = vector.load %arg1[%c0_33, %c0_34, %c36] : memref<1x16x342xf32, #tpu.memory_space<vmem>>, vector<1x16x288xf32>
    %38 = vector.shape_cast %37 : vector<1x16x288xf32> to vector<16x288xf32>
    %c6 = arith.constant 6 : index
    %c0_35 = arith.constant 0 : index
    %c0_36 = arith.constant 0 : index
    %39 = vector.load %arg2[%c6, %c0_35, %c0_36] : memref<9x16x16xf32, #tpu.memory_space<vmem>>, vector<1x16x16xf32>
    %40 = vector.shape_cast %39 : vector<1x16x16xf32> to vector<16x16xf32>
    %cst_37 = arith.constant dense<0.000000e+00> : vector<16x288xf32>
    %41 = tpu.matmul %40, %38, %cst_37 {dimension_numbers = #tpu.dot_dimension_numbers<[1], [0], [0], [1], [0, 0, 1, 1], [], []>} : vector<16x16xf32>, vector<16x288xf32>, vector<16x288xf32> -> vector<16x288xf32>
    %42 = arith.addf %36, %41 : vector<16x288xf32>
    %c0_38 = arith.constant 0 : index
    %c0_39 = arith.constant 0 : index
    %c37 = arith.constant 37 : index
    %43 = vector.load %arg1[%c0_38, %c0_39, %c37] : memref<1x16x342xf32, #tpu.memory_space<vmem>>, vector<1x16x288xf32>
    %44 = vector.shape_cast %43 : vector<1x16x288xf32> to vector<16x288xf32>
    %c7 = arith.constant 7 : index
    %c0_40 = arith.constant 0 : index
    %c0_41 = arith.constant 0 : index
    %45 = vector.load %arg2[%c7, %c0_40, %c0_41] : memref<9x16x16xf32, #tpu.memory_space<vmem>>, vector<1x16x16xf32>
    %46 = vector.shape_cast %45 : vector<1x16x16xf32> to vector<16x16xf32>
    %cst_42 = arith.constant dense<0.000000e+00> : vector<16x288xf32>
    %47 = tpu.matmul %46, %44, %cst_42 {dimension_numbers = #tpu.dot_dimension_numbers<[1], [0], [0], [1], [0, 0, 1, 1], [], []>} : vector<16x16xf32>, vector<16x288xf32>, vector<16x288xf32> -> vector<16x288xf32>
    %48 = arith.addf %42, %47 : vector<16x288xf32>
    %c0_43 = arith.constant 0 : index
    %c0_44 = arith.constant 0 : index
    %c38 = arith.constant 38 : index
    %49 = vector.load %arg1[%c0_43, %c0_44, %c38] : memref<1x16x342xf32, #tpu.memory_space<vmem>>, vector<1x16x288xf32>
    %50 = vector.shape_cast %49 : vector<1x16x288xf32> to vector<16x288xf32>
    %c8 = arith.constant 8 : index
    %c0_45 = arith.constant 0 : index
    %c0_46 = arith.constant 0 : index
    %51 = vector.load %arg2[%c8, %c0_45, %c0_46] : memref<9x16x16xf32, #tpu.memory_space<vmem>>, vector<1x16x16xf32>
    %52 = vector.shape_cast %51 : vector<1x16x16xf32> to vector<16x16xf32>
    %cst_47 = arith.constant dense<0.000000e+00> : vector<16x288xf32>
    %53 = tpu.matmul %52, %50, %cst_47 {dimension_numbers = #tpu.dot_dimension_numbers<[1], [0], [0], [1], [0, 0, 1, 1], [], []>} : vector<16x16xf32>, vector<16x288xf32>, vector<16x288xf32> -> vector<16x288xf32>
    %54 = arith.addf %48, %53 : vector<16x288xf32>
    %c0_48 = arith.constant 0 : index
    %c0_49 = arith.constant 0 : index
    %55 = vector.load %arg3[%c0_48, %c0_49] : memref<16x1xf32, #tpu.memory_space<vmem>>, vector<16x1xf32>
    %56 = vector.broadcast %55 : vector<16x1xf32> to vector<16x288xf32>
    %57 = arith.addf %54, %56 : vector<16x288xf32>
    %c0_50 = arith.constant 0 : index
    %c0_51 = arith.constant 0 : index
    %c0_52 = arith.constant 0 : index
    %58 = vector.load %arg4[%c0_50, %c0_51, %c0_52] : memref<1x16x288xf32, #tpu.memory_space<vmem>>, vector<1x16x288xf32>
    %59 = vector.shape_cast %58 : vector<1x16x288xf32> to vector<16x288xf32>
    %60 = vector.shape_cast %57 : vector<16x288xf32> to vector<1x16x288xf32>
    tpu.vector_store %arg4[%c0_50, %c0_51, %c0_52], %60 {strides = array<i32>} : memref<1x16x288xf32, #tpu.memory_space<vmem>>, vector<1x16x288xf32>,
    return
  }
  func.func @transform_0(%arg0: i32) -> (i32, i32, i32) {
    %c0_i32 = arith.constant 0 : i32
    %c0_i32_0 = arith.constant 0 : i32
    %c0_i32_1 = arith.constant 0 : i32
    return %arg0, %c0_i32, %c0_i32_0 : i32, i32, i32
  }
  func.func @transform_1(%arg0: i32) -> (i32, i32, i32) {
    %c0_i32 = arith.constant 0 : i32
    %c0_i32_0 = arith.constant 0 : i32
    %c0_i32_1 = arith.constant 0 : i32
    %c0_i32_2 = arith.constant 0 : i32
    return %c0_i32, %c0_i32_0, %c0_i32_1 : i32, i32, i32
  }
  func.func @transform_2(%arg0: i32) -> (i32, i32) {
    %c0_i32 = arith.constant 0 : i32
    %c0_i32_0 = arith.constant 0 : i32
    %c0_i32_1 = arith.constant 0 : i32
    return %c0_i32, %c0_i32_0 : i32, i32
  }
  func.func @transform_3(%arg0: i32) -> (i32, i32, i32) {
    %c0_i32 = arith.constant 0 : i32
    %c0_i32_0 = arith.constant 0 : i32
    %c0_i32_1 = arith.constant 0 : i32
    return %arg0, %c0_i32, %c0_i32_0 : i32, i32, i32
  }
}

</mosaic_0001>

<llo_original>
// kernel: dgconv2d_forward.1
$region0: #{dgconv2d_forward.1}
  #allocation0 [shape = 'u32[]', space=smem, size = 0x4, offset = 0x4, fixed_abs, tag = 'smem constant byte address 0x4 - core index']
  #allocation1 [shape = 'u32[144,128]{1,0:T(1,128)}', space=vmem, size = 0x12000, scoped, tag = 'internal scratch']
  %s0 = inlined_call_operand.vmem [shape: f32[2,16,342], index: 0, kind: input, shape index: {}]
  %s1 = inlined_call_operand.vmem [shape: f32[9,16,16], index: 1, kind: input, shape index: {}]
  %s2 = inlined_call_operand.vmem [shape: f32[16,1], index: 2, kind: input, shape index: {}]
  %s3 = inlined_call_operand.vmem [shape: f32[2,16,288], index: 3, kind: output, shape index: {}]
  %s4 = sld [smem:[#allocation0]]
  $region45: #{dgconv2d_forward.1} parent=0
    _
  %s6 = ssub.s32 1, %s4
  %s7 = scalar_select 0, %s6, %s4
  loop: start=0, step=1, limit=4
  $region2: #{dgconv2d_forward.1} parent=0 // loop_pre_header
    _
  $region3: #{dgconv2d_forward.1} parent=0 // loop_header
    %s9 = sphi 0, %s13
    %p10 = scmp.ge.s32.totalorder %s9, 4
    %s19 = sphi 0, %s21
    %s22 = sphi 0, %s19
    %s23 = sphi 0, %s22
    %s39 = sphi 0, %s23
    %s43 = sphi 0, %s43
    %s45 = sphi 0, %s43
    %s46 = sphi 0, %s45
    %s60 = sphi 0, %s46
    %s64 = sphi 0, %s64
    %s66 = sphi 0, %s64
    %s67 = sphi 0, %s66
    %s81 = sphi 0, %s67
    %s87 = sphi 0, %s89
    %s90 = sphi 0, %s87
    %s91 = sphi 0, %s90
    %s107 = sphi 0, %s91
  $region4: #{dgconv2d_forward.1} parent=0 // loop_header_branch
    %12 = sbr.rel (%p10) target = $region8
  $region5: #{dgconv2d_forward.1} parent=0 // loop_body
    %s14 = ssub.s32 %s9, 1
    %s15 = ssub.s32 %s9, 2
    %s16 = sadd.s32 %s9, 1
    %s17 = ssub.s32 %s9, %s16
    %p18 = scmp.eq.s32.totalorder %s17, 0
    %s20 = sadd.s32 %s19, 1
    %s21 = scalar_select %p18, %s19, %s20
    %p24 = pneg %p18
    %p25 = scmp.eq.s32.totalorder %s9, 1
    %p26 = por %p24, %p25
    %p27 = scmp.ne.s32.totalorder %s19, %s22
    %p28 = scmp.eq.s32.totalorder %s9, 0
    %p29 = por %p27, %p28
    %p30 = scmp.ne.s32.totalorder %s19, %s22
    %p31 = scmp.eq.s32.totalorder %s14, 1
    %p32 = por %p30, %p31
    %p33 = scmp.ne.s32.totalorder %s22, %s23
    %p34 = scmp.eq.s32.totalorder %s14, 0
    %p35 = por %p33, %p34
    %p36 = scmp.ne.s32.totalorder %s22, %s23
    %p37 = scmp.eq.s32.totalorder %s15, 1
    %p38 = por %p36, %p37
    %p40 = scmp.ne.s32.totalorder %s23, %s39
    %p41 = scmp.eq.s32.totalorder %s15, 0
    %p42 = por %p40, %p41
    %s44 = sadd.s32 %s43, 1
    %p47 = scmp.eq.s32.totalorder %s9, 1
    %p48 = scmp.ne.s32.totalorder %s43, %s45
    %p49 = scmp.eq.s32.totalorder %s9, 0
    %p50 = por %p48, %p49
    %p51 = scmp.ne.s32.totalorder %s43, %s45
    %p52 = scmp.eq.s32.totalorder %s14, 1
    %p53 = por %p51, %p52
    %p54 = scmp.ne.s32.totalorder %s45, %s46
    %p55 = scmp.eq.s32.totalorder %s14, 0
    %p56 = por %p54, %p55
    %p57 = scmp.ne.s32.totalorder %s45, %s46
    %p58 = scmp.eq.s32.totalorder %s15, 1
    %p59 = por %p57, %p58
    %p61 = scmp.ne.s32.totalorder %s46, %s60
    %p62 = scmp.eq.s32.totalorder %s15, 0
    %p63 = por %p61, %p62
    %s65 = sadd.s32 %s64, 1
    %p68 = scmp.eq.s32.totalorder %s9, 1
    %p69 = scmp.ne.s32.totalorder %s64, %s66
    %p70 = scmp.eq.s32.totalorder %s9, 0
    %p71 = por %p69, %p70
    %p72 = scmp.ne.s32.totalorder %s64, %s66
    %p73 = scmp.eq.s32.totalorder %s14, 1
    %p74 = por %p72, %p73
    %p75 = scmp.ne.s32.totalorder %s66, %s67
    %p76 = scmp.eq.s32.totalorder %s14, 0
    %p77 = por %p75, %p76
    %p78 = scmp.ne.s32.totalorder %s66, %s67
    %p79 = scmp.eq.s32.totalorder %s15, 1
    %p80 = por %p78, %p79
    %p82 = scmp.ne.s32.totalorder %s67, %s81
    %p83 = scmp.eq.s32.totalorder %s15, 0
    %p84 = por %p82, %p83
    %s85 = ssub.s32 %s9, %s16
    %p86 = scmp.eq.s32.totalorder %s85, 0
    %s88 = sadd.s32 %s87, 1
    %s89 = scalar_select %p86, %s87, %s88
    %p92 = pneg %p86
    %p93 = scmp.eq.s32.totalorder %s9, 1
    %p94 = por %p92, %p93
    %p95 = scmp.ne.s32.totalorder %s87, %s90
    %p96 = scmp.eq.s32.totalorder %s9, 0
    %p97 = por %p95, %p96
    %p98 = scmp.ne.s32.totalorder %s87, %s90
    %p99 = scmp.eq.s32.totalorder %s14, 1
    %p100 = por %p98, %p99
    %p101 = scmp.ne.s32.totalorder %s90, %s91
    %p102 = scmp.eq.s32.totalorder %s14, 0
    %p103 = por %p101, %p102
    %p104 = scmp.ne.s32.totalorder %s90, %s91
    %p105 = scmp.eq.s32.totalorder %s15, 1
    %p106 = por %p104, %p105
    %p108 = scmp.ne.s32.totalorder %s91, %s107
    %p109 = scmp.eq.s32.totalorder %s15, 0
    %p110 = por %p108, %p109
    %p111 = scmp.le.s32.totalorder 1, %s9
    %p112 = scmp.lt.s32.totalorder %s9, 3
    %p113 = pnand %p111, %p112
    %p114 = pneg %p113
    // Predicated region
    $region9: #{dgconv2d_forward.1} parent=5 // pred_check
      _
    $region10: #{dgconv2d_forward.1} parent=5 // pred_check_branch
      %116 = sbr.rel (%p113) target = $region12
    $region11: #{dgconv2d_forward.1} parent=5 // pred_region
      %s117 = ssub.s32 %s9, 1
      // Predicated region
      $region13: #{dgconv2d_forward.1} parent=11 // pred_check
        %p118 = pneg %p56
      $region14: #{dgconv2d_forward.1} parent=11 // pred_check_branch
        %120 = sbr.rel (%p118) target = $region16
      $region15: #{dgconv2d_forward.1} parent=11 // pred_region
        _
      $region16: #{dgconv2d_forward.1} parent=11 // pred_fallthru
        _
      // Predicated region
      $region17: #{dgconv2d_forward.1} parent=11 // pred_check
        %p121 = pneg %p77
      $region18: #{dgconv2d_forward.1} parent=11 // pred_check_branch
        %123 = sbr.rel (%p121) target = $region20
      $region19: #{dgconv2d_forward.1} parent=11 // pred_region
        _
      $region20: #{dgconv2d_forward.1} parent=11 // pred_fallthru
        _
    $region12: #{dgconv2d_forward.1} parent=5 // pred_fallthru
      _
    %p124 = scmp.lt.s32.totalorder %s9, 2
    // Predicated region
    $region21: #{dgconv2d_forward.1} parent=5 // pred_check
      %p125 = pneg %p124
    $region22: #{dgconv2d_forward.1} parent=5 // pred_check_branch
      %127 = sbr.rel (%p125) target = $region24
    $region23: #{dgconv2d_forward.1} parent=5 // pred_region
      // Predicated region
      $region25: #{dgconv2d_forward.1} parent=23 // pred_check
        %p128 = pneg %p29
      $region26: #{dgconv2d_forward.1} parent=23 // pred_check_branch
        %130 = sbr.rel (%p128) target = $region28
      $region27: #{dgconv2d_forward.1} parent=23 // pred_region
        %p131 = scmp.lt.s32.totalorder %s9, 1
        %s132 = scalar_select %p131, %s9, 1
        %s133 = smul.addr %s132, 6
        %s134 = smul.addr %s133, 8
        %s135 = scalar_lea.vmem %s0, %s134
      $region28: #{dgconv2d_forward.1} parent=23 // pred_fallthru
        _
    $region24: #{dgconv2d_forward.1} parent=5 // pred_fallthru
      _
    %p136 = scmp.le.s32.totalorder 1, %s9
    %p137 = scmp.lt.s32.totalorder %s9, 3
    %p138 = pnand %p136, %p137
    %p139 = pneg %p138
    // Predicated region
    $region29: #{dgconv2d_forward.1} parent=5 // pred_check
      _
    $region30: #{dgconv2d_forward.1} parent=5 // pred_check_branch
      %141 = sbr.rel (%p138) target = $region32
    $region31: #{dgconv2d_forward.1} parent=5 // pred_region
      %s142 = ssub.s32 %s9, 1
      %p143 = scmp.lt.s32.totalorder %s14, 1
      %s144 = scalar_select %p143, %s14, 1
      %s145 = smul.addr %s144, 6
      %s146 = smul.addr %s145, 8
      %s147 = scalar_lea.vmem %s0, %s146
      %p148 = pneg %p35
      %p149 = pneg %p32
      %p150 = pneg %p56
      %p151 = pneg %p53
      %p152 = pneg %p77
      %p153 = pneg %p74
      %p154 = pneg %p103
      %p155 = pneg %p100
      %p156 = scmp.lt.s32.totalorder %s14, 1
      %s157 = scalar_select %p156, %s14, 1
      %s158 = smul.addr %s157, 6
      %s159 = smul.addr %s158, 8
      %s160 = scalar_lea.vmem %s3, %s159
      %p161 = scmp.lt.s32.totalorder %s14, 1
      %s162 = scalar_select %p161, %s14, 1
      %s163 = smul.addr %s162, 6
      %s164 = smul.addr %s163, 8
      %s165 = scalar_lea.vmem %s0, %s164
      %p166 = scmp.lt.s32.totalorder %s14, 1
      %s167 = scalar_select %p166, %s14, 1
      %s168 = smul.addr %s167, 6
      %s169 = smul.addr %s168, 8
      %s170 = scalar_lea.vmem %s3, %s169
      %v171 = vld [vmem:[%s165] sm:$0xff]
      %v172 = vld [vmem:[%s165 + $0x8] sm:$0xff]
      %v173 = vld [vmem:[%s165 + $0x10] sm:$0xff]
      %v174 = vld [vmem:[%s165 + $0x18] sm:$0xff]
      %v175 = vld [vmem:[%s165 + $0x20] sm:$0xff]
      %v176 = vld [vmem:[%s165 + $0x28] sm:$0xff]
      %v177 = vld [vmem:[%s1] sm:$0xff]
      %v178 = vld [vmem:[%s1 + $0x8] sm:$0xff]
      %s179 = scalar_lea.vmem %s1, 16
      %v180 = vld [vmem:[%s179] sm:$0xff]
      %v181 = vld [vmem:[%s179 + $0x8] sm:$0xff]
      %188 = vrot.lane.b32.xlu0 %v171, 127
      %v189 = vpop.permute.xlu0 %188
      %190 = vrot.lane.b32.xlu0 %v172, 127
      %v191 = vpop.permute.xlu0 %190
      %192 = vrot.lane.b32.xlu0 %v173, 127
      %v193 = vpop.permute.xlu0 %192
      %194 = vrot.lane.b32.xlu0 %v174, 127
      %v195 = vpop.permute.xlu0 %194
      %196 = vrot.lane.b32.xlu0 %v175, 127
      %v197 = vpop.permute.xlu0 %196
      %198 = vrot.lane.b32.xlu0 %v176, 127
      %v199 = vpop.permute.xlu0 %198
      %vm200 = vcmask 1039360
      %v201 = vsel %vm200, %v189, %v191
      %v202 = vsel %vm200, %v191, %v193
      %v203 = vsel %vm200, %v195, %v197
      %v204 = vsel %vm200, %v197, %v199
      %vm211 = vcmask 130048
      %v213 = vsel %vm211, %v180, 0
      %v216 = vsel %vm211, %v181, 0
      %218 = vmatprep.subr.mxu0 %v202
      %219 = vmatpush1.msra.mxu0 %v201
      %220 = vmatprep.subr.mxu0 %v204
      %221 = vmatpush1.msra.mxu0 %v203
      %222 = vmatprep.subr.mxu0 0.0
      %223 = vmatpush1.msra.mxu0 0.0
      %224 = vmatprep.subr.mxu0 0.0
      %225 = vmatpush1.msra.mxu0 0.0
      %226 = vmatprep.subr.mxu0 0.0
      %227 = vmatpush1.msra.mxu0 0.0
      %228 = vmatprep.subr.mxu0 0.0
      %229 = vmatpush1.msra.mxu0 0.0
      %230 = vmatprep.subr.mxu0 0.0
      %231 = vmatpush1.msra.mxu0 0.0
      %232 = vmatprep.subr.mxu0 0.0
      %233 = vmatpush1.msra.mxu0 0.0
      %234 = vmatprep.subr.mxu0 0.0
      %235 = vmatpush1.msra.mxu0 0.0
      %236 = vmatprep.subr.mxu0 0.0
      %237 = vmatpush1.msra.mxu0 0.0
      %238 = vmatprep.subr.mxu0 0.0
      %239 = vmatpush1.msra.mxu0 0.0
      %240 = vmatprep.subr.mxu0 0.0
      %241 = vmatpush1.msra.mxu0 0.0
      %242 = vmatprep.subr.mxu0 0.0
      %243 = vmatpush1.msra.mxu0 0.0
      %244 = vmatprep.subr.mxu0 0.0
      %245 = vmatpush1.msra.mxu0 0.0
      %246 = vmatprep.subr.mxu0 0.0
      %247 = vmatpush1.msra.mxu0 0.0
      %248 = vmatprep.subr.mxu0 0.0
      %249 = vmatpush1.msra.mxu0 0.0
      %250 = vmatprep.subr.mxu0 0.0
      %251 = vmatpush1.msra.mxu0 0.0
      %252 = vmatprep.subr.mxu0 0.0
      %253 = vmatpush1.msra.mxu0 0.0
      %254 = vmatprep.subr.mxu0 0.0
      %255 = vmatpush1.msra.mxu0 0.0
      %256 = vmatprep.subr.mxu0 0.0
      %257 = vmatpush1.msra.mxu0 0.0
      %258 = vmatprep.subr.mxu0 0.0
      %259 = vmatpush1.msra.mxu0 0.0
      %260 = vmatprep.subr.mxu0 0.0
      %261 = vmatpush1.msra.mxu0 0.0
      %262 = vmatprep.subr.mxu0 0.0
      %263 = vmatpush1.msra.mxu0 0.0
      %264 = vmatprep.subr.mxu0 0.0
      %265 = vmatpush1.msra.mxu0 0.0
      %266 = vmatprep.subr.mxu0 0.0
      %267 = vmatpush1.msra.mxu0 0.0
      %268 = vmatprep.subr.mxu0 0.0
      %269 = vmatpush1.msra.mxu0 0.0
      %270 = vmatprep.subr.mxu0 0.0
      %271 = vmatpush1.msra.mxu0 0.0
      %272 = vmatprep.subr.mxu0 0.0
      %273 = vmatpush1.msra.mxu0 0.0
      %274 = vmatprep.subr.mxu0 0.0
      %275 = vmatpush1.msra.mxu0 0.0
      %276 = vmatprep.subr.mxu0 0.0
      %277 = vmatpush1.msra.mxu0 0.0
      %278 = vmatprep.subr.mxu0 0.0
      %279 = vmatpush1.msra.mxu0 0.0
      %280 = vmatprep.subr.mxu0 0.0
      %281 = vmatpush1.msra.mxu0 0.0
      %282 = vmatprep.mubr.f32.mxu0 0.0
      %283 = vmatmul.mubr.f32.gmra.mrb[0].mxu0 %v213
      %v284 = vpop.f32.mrb[0].mxu0
      %v285 = vadd.f32 0.0, %v284
      %v286 = vpop.f32.mrb[0].mxu0
      %v287 = vadd.f32 0.0, %v286
      %288 = vmatprep.mubr.f32.mxu0 0.0
      %289 = vmatmul.mubr.f32.gmra.mrb[0].mxu0 %v216
      %v290 = vpop.f32.mrb[0].mxu0
      %v291 = vadd.f32 0.0, %v290
      %v292 = vpop.f32.mrb[0].mxu0
      %v293 = vadd.f32 0.0, %v292
      %294 = vdwg.mxu0
      %295 = vmatprep.subr.mxu0 0.0
      %296 = vmatpush1.msra.mxu0 %v193
      %297 = vmatprep.subr.mxu0 0.0
      %298 = vmatpush1.msra.mxu0 %v199
      %299 = vmatprep.subr.mxu0 0.0
      %300 = vmatpush1.msra.mxu0 0.0
      %301 = vmatprep.subr.mxu0 0.0
      %302 = vmatpush1.msra.mxu0 0.0
      %303 = vmatprep.subr.mxu0 0.0
      %304 = vmatpush1.msra.mxu0 0.0
      %305 = vmatprep.subr.mxu0 0.0
      %306 = vmatpush1.msra.mxu0 0.0
      %307 = vmatprep.subr.mxu0 0.0
      %308 = vmatpush1.msra.mxu0 0.0
      %309 = vmatprep.subr.mxu0 0.0
      %310 = vmatpush1.msra.mxu0 0.0
      %311 = vmatprep.subr.mxu0 0.0
      %312 = vmatpush1.msra.mxu0 0.0
      %313 = vmatprep.subr.mxu0 0.0
      %314 = vmatpush1.msra.mxu0 0.0
      %315 = vmatprep.subr.mxu0 0.0
      %316 = vmatpush1.msra.mxu0 0.0
      %317 = vmatprep.subr.mxu0 0.0
      %318 = vmatpush1.msra.mxu0 0.0
      %319 = vmatprep.subr.mxu0 0.0
      %320 = vmatpush1.msra.mxu0 0.0
      %321 = vmatprep.subr.mxu0 0.0
      %322 = vmatpush1.msra.mxu0 0.0
      %323 = vmatprep.subr.mxu0 0.0
      %324 = vmatpush1.msra.mxu0 0.0
      %325 = vmatprep.subr.mxu0 0.0
      %326 = vmatpush1.msra.mxu0 0.0
      %327 = vmatprep.subr.mxu0 0.0
      %328 = vmatpush1.msra.mxu0 0.0
      %329 = vmatprep.subr.mxu0 0.0
      %330 = vmatpush1.msra.mxu0 0.0
      %331 = vmatprep.subr.mxu0 0.0
      %332 = vmatpush1.msra.mxu0 0.0
      %333 = vmatprep.subr.mxu0 0.0
      %334 = vmatpush1.msra.mxu0 0.0
      %335 = vmatprep.subr.mxu0 0.0
      %336 = vmatpush1.msra.mxu0 0.0
      %337 = vmatprep.subr.mxu0 0.0
      %338 = vmatpush1.msra.mxu0 0.0
      %339 = vmatprep.subr.mxu0 0.0
      %340 = vmatpush1.msra.mxu0 0.0
      %341 = vmatprep.subr.mxu0 0.0
      %342 = vmatpush1.msra.mxu0 0.0
      %343 = vmatprep.subr.mxu0 0.0
      %344 = vmatpush1.msra.mxu0 0.0
      %345 = vmatprep.subr.mxu0 0.0
      %346 = vmatpush1.msra.mxu0 0.0
      %347 = vmatprep.subr.mxu0 0.0
      %348 = vmatpush1.msra.mxu0 0.0
      %349 = vmatprep.subr.mxu0 0.0
      %350 = vmatpush1.msra.mxu0 0.0
      %351 = vmatprep.subr.mxu0 0.0
      %352 = vmatpush1.msra.mxu0 0.0
      %353 = vmatprep.subr.mxu0 0.0
      %354 = vmatpush1.msra.mxu0 0.0
      %355 = vmatprep.subr.mxu0 0.0
      %356 = vmatpush1.msra.mxu0 0.0
      %357 = vmatprep.subr.mxu0 0.0
      %358 = vmatpush1.msra.mxu0 0.0
      %359 = vmatprep.mubr.f32.mxu0 0.0
      %360 = vmatmul.mubr.f32.gmra.mrb[0].mxu0 %v213
      %v361 = vpop.f32.mrb[0].mxu0
      %v362 = vadd.f32 0.0, %v361
      %v363 = vpop.f32.mrb[0].mxu0
      %364 = vmatprep.mubr.f32.mxu0 0.0
      %365 = vmatmul.mubr.f32.gmra.mrb[0].mxu0 %v216
      %v366 = vpop.f32.mrb[0].mxu0
      %v367 = vadd.f32 0.0, %v366
      %v368 = vpop.f32.mrb[0].mxu0
      %369 = vdwg.mxu0
      %v371 = vsel %vm211, %v177, 0
      %v374 = vsel %vm211, %v178, 0
      %376 = vmatprep.subr.mxu0 %v172
      %377 = vmatpush1.msra.mxu0 %v171
      %378 = vmatprep.subr.mxu0 %v175
      %379 = vmatpush1.msra.mxu0 %v174
      %380 = vmatprep.subr.mxu0 0.0
      %381 = vmatpush1.msra.mxu0 0.0
      %382 = vmatprep.subr.mxu0 0.0
      %383 = vmatpush1.msra.mxu0 0.0
      %384 = vmatprep.subr.mxu0 0.0
      %385 = vmatpush1.msra.mxu0 0.0
      %386 = vmatprep.subr.mxu0 0.0
      %387 = vmatpush1.msra.mxu0 0.0
      %388 = vmatprep.subr.mxu0 0.0
      %389 = vmatpush1.msra.mxu0 0.0
      %390 = vmatprep.subr.mxu0 0.0
      %391 = vmatpush1.msra.mxu0 0.0
      %392 = vmatprep.subr.mxu0 0.0
      %393 = vmatpush1.msra.mxu0 0.0
      %394 = vmatprep.subr.mxu0 0.0
      %395 = vmatpush1.msra.mxu0 0.0
      %396 = vmatprep.subr.mxu0 0.0
      %397 = vmatpush1.msra.mxu0 0.0
      %398 = vmatprep.subr.mxu0 0.0
      %399 = vmatpush1.msra.mxu0 0.0
      %400 = vmatprep.subr.mxu0 0.0
      %401 = vmatpush1.msra.mxu0 0.0
      %402 = vmatprep.subr.mxu0 0.0
      %403 = vmatpush1.msra.mxu0 0.0
      %404 = vmatprep.subr.mxu0 0.0
      %405 = vmatpush1.msra.mxu0 0.0
      %406 = vmatprep.subr.mxu0 0.0
      %407 = vmatpush1.msra.mxu0 0.0
      %408 = vmatprep.subr.mxu0 0.0
      %409 = vmatpush1.msra.mxu0 0.0
      %410 = vmatprep.subr.mxu0 0.0
      %411 = vmatpush1.msra.mxu0 0.0
      %412 = vmatprep.subr.mxu0 0.0
      %413 = vmatpush1.msra.mxu0 0.0
      %414 = vmatprep.subr.mxu0 0.0
      %415 = vmatpush1.msra.mxu0 0.0
      %416 = vmatprep.subr.mxu0 0.0
      %417 = vmatpush1.msra.mxu0 0.0
      %418 = vmatprep.subr.mxu0 0.0
      %419 = vmatpush1.msra.mxu0 0.0
      %420 = vmatprep.subr.mxu0 0.0
      %421 = vmatpush1.msra.mxu0 0.0
      %422 = vmatprep.subr.mxu0 0.0
      %423 = vmatpush1.msra.mxu0 0.0
      %424 = vmatprep.subr.mxu0 0.0
      %425 = vmatpush1.msra.mxu0 0.0
      %426 = vmatprep.subr.mxu0 0.0
      %427 = vmatpush1.msra.mxu0 0.0
      %428 = vmatprep.subr.mxu0 0.0
      %429 = vmatpush1.msra.mxu0 0.0
      %430 = vmatprep.subr.mxu0 0.0
      %431 = vmatpush1.msra.mxu0 0.0
      %432 = vmatprep.subr.mxu0 0.0
      %433 = vmatpush1.msra.mxu0 0.0
      %434 = vmatprep.subr.mxu0 0.0
      %435 = vmatpush1.msra.mxu0 0.0
      %436 = vmatprep.subr.mxu0 0.0
      %437 = vmatpush1.msra.mxu0 0.0
      %438 = vmatprep.subr.mxu0 0.0
      %439 = vmatpush1.msra.mxu0 0.0
      %440 = vmatprep.mubr.f32.mxu0 0.0
      %441 = vmatmul.mubr.f32.gmra.mrb[0].mxu0 %v371
      %v442 = vpop.f32.mrb[0].mxu0
      %v443 = vadd.f32 %v285, %v442
      %v444 = vpop.f32.mrb[0].mxu0
      %v445 = vadd.f32 %v287, %v444
      %446 = vmatprep.mubr.f32.mxu0 0.0
      %447 = vmatmul.mubr.f32.gmra.mrb[0].mxu0 %v374
      %v448 = vpop.f32.mrb[0].mxu0
      %v449 = vadd.f32 %v291, %v448
      %v450 = vpop.f32.mrb[0].mxu0
      %v451 = vadd.f32 %v293, %v450
      %452 = vdwg.mxu0
      %453 = vmatprep.subr.mxu0 0.0
      %454 = vmatpush1.msra.mxu0 %v173
      %455 = vmatprep.subr.mxu0 0.0
      %456 = vmatpush1.msra.mxu0 %v176
      %457 = vmatprep.subr.mxu0 0.0
      %458 = vmatpush1.msra.mxu0 0.0
      %459 = vmatprep.subr.mxu0 0.0
      %460 = vmatpush1.msra.mxu0 0.0
      %461 = vmatprep.subr.mxu0 0.0
      %462 = vmatpush1.msra.mxu0 0.0
      %463 = vmatprep.subr.mxu0 0.0
      %464 = vmatpush1.msra.mxu0 0.0
      %465 = vmatprep.subr.mxu0 0.0
      %466 = vmatpush1.msra.mxu0 0.0
      %467 = vmatprep.subr.mxu0 0.0
      %468 = vmatpush1.msra.mxu0 0.0
      %469 = vmatprep.subr.mxu0 0.0
      %470 = vmatpush1.msra.mxu0 0.0
      %471 = vmatprep.subr.mxu0 0.0
      %472 = vmatpush1.msra.mxu0 0.0
      %473 = vmatprep.subr.mxu0 0.0
      %474 = vmatpush1.msra.mxu0 0.0
      %475 = vmatprep.subr.mxu0 0.0
      %476 = vmatpush1.msra.mxu0 0.0
      %477 = vmatprep.subr.mxu0 0.0
      %478 = vmatpush1.msra.mxu0 0.0
      %479 = vmatprep.subr.mxu0 0.0
      %480 = vmatpush1.msra.mxu0 0.0
      %481 = vmatprep.subr.mxu0 0.0
      %482 = vmatpush1.msra.mxu0 0.0
      %483 = vmatprep.subr.mxu0 0.0
      %484 = vmatpush1.msra.mxu0 0.0
      %485 = vmatprep.subr.mxu0 0.0
      %486 = vmatpush1.msra.mxu0 0.0
      %487 = vmatprep.subr.mxu0 0.0
      %488 = vmatpush1.msra.mxu0 0.0
      %489 = vmatprep.subr.mxu0 0.0
      %490 = vmatpush1.msra.mxu0 0.0
      %491 = vmatprep.subr.mxu0 0.0
      %492 = vmatpush1.msra.mxu0 0.0
      %493 = vmatprep.subr.mxu0 0.0
      %494 = vmatpush1.msra.mxu0 0.0
      %495 = vmatprep.subr.mxu0 0.0
      %496 = vmatpush1.msra.mxu0 0.0
      %497 = vmatprep.subr.mxu0 0.0
      %498 = vmatpush1.msra.mxu0 0.0
      %499 = vmatprep.subr.mxu0 0.0
      %500 = vmatpush1.msra.mxu0 0.0
      %501 = vmatprep.subr.mxu0 0.0
      %502 = vmatpush1.msra.mxu0 0.0
      %503 = vmatprep.subr.mxu0 0.0
      %504 = vmatpush1.msra.mxu0 0.0
      %505 = vmatprep.subr.mxu0 0.0
      %506 = vmatpush1.msra.mxu0 0.0
      %507 = vmatprep.subr.mxu0 0.0
      %508 = vmatpush1.msra.mxu0 0.0
      %509 = vmatprep.subr.mxu0 0.0
      %510 = vmatpush1.msra.mxu0 0.0
      %511 = vmatprep.subr.mxu0 0.0
      %512 = vmatpush1.msra.mxu0 0.0
      %513 = vmatprep.subr.mxu0 0.0
      %514 = vmatpush1.msra.mxu0 0.0
      %515 = vmatprep.subr.mxu0 0.0
      %516 = vmatpush1.msra.mxu0 0.0
      %517 = vmatprep.mubr.f32.mxu0 0.0
      %518 = vmatmul.mubr.f32.gmra.mrb[0].mxu0 %v371
      %v519 = vpop.f32.mrb[0].mxu0
      %v520 = vadd.f32 %v362, %v519
      %v521 = vpop.f32.mrb[0].mxu0
      %522 = vmatprep.mubr.f32.mxu0 0.0
      %523 = vmatmul.mubr.f32.gmra.mrb[0].mxu0 %v374
      %v524 = vpop.f32.mrb[0].mxu0
      %v525 = vadd.f32 %v367, %v524
      %v526 = vpop.f32.mrb[0].mxu0
      %527 = vdwg.mxu0
      %s528 = scalar_lea.vmem %s1, 32
      %v529 = vld [vmem:[%s528] sm:$0xff]
      %v530 = vld [vmem:[%s528 + $0x8] sm:$0xff]
      %531 = vrot.lane.b32.xlu0 %v171, 126
      %v532 = vpop.permute.xlu0 %531
      %533 = vrot.lane.b32.xlu0 %v172, 126
      %v534 = vpop.permute.xlu0 %533
      %535 = vrot.lane.b32.xlu0 %v173, 126
      %v536 = vpop.permute.xlu0 %535
      %537 = vrot.lane.b32.xlu0 %v174, 126
      %v538 = vpop.permute.xlu0 %537
      %539 = vrot.lane.b32.xlu0 %v175, 126
      %v540 = vpop.permute.xlu0 %539
      %541 = vrot.lane.b32.xlu0 %v176, 126
      %v542 = vpop.permute.xlu0 %541
      %vm543 = vcmask 1031168
      %v544 = vsel %vm543, %v532, %v534
      %v545 = vsel %vm543, %v534, %v536
      %v546 = vsel %vm543, %v538, %v540
      %v547 = vsel %vm543, %v540, %v542
      %v555 = vsel %vm211, %v529, 0
      %v558 = vsel %vm211, %v530, 0
      %560 = vmatprep.subr.mxu0 %v545
      %561 = vmatpush1.msra.mxu0 %v544
      %562 = vmatprep.subr.mxu0 %v547
      %563 = vmatpush1.msra.mxu0 %v546
      %564 = vmatprep.subr.mxu0 0.0
      %565 = vmatpush1.msra.mxu0 0.0
      %566 = vmatprep.subr.mxu0 0.0
      %567 = vmatpush1.msra.mxu0 0.0
      %568 = vmatprep.subr.mxu0 0.0
      %569 = vmatpush1.msra.mxu0 0.0
      %570 = vmatprep.subr.mxu0 0.0
      %571 = vmatpush1.msra.mxu0 0.0
      %572 = vmatprep.subr.mxu0 0.0
      %573 = vmatpush1.msra.mxu0 0.0
      %574 = vmatprep.subr.mxu0 0.0
      %575 = vmatpush1.msra.mxu0 0.0
      %576 = vmatprep.subr.mxu0 0.0
      %577 = vmatpush1.msra.mxu0 0.0
      %578 = vmatprep.subr.mxu0 0.0
      %579 = vmatpush1.msra.mxu0 0.0
      %580 = vmatprep.subr.mxu0 0.0
      %581 = vmatpush1.msra.mxu0 0.0
      %582 = vmatprep.subr.mxu0 0.0
      %583 = vmatpush1.msra.mxu0 0.0
      %584 = vmatprep.subr.mxu0 0.0
      %585 = vmatpush1.msra.mxu0 0.0
      %586 = vmatprep.subr.mxu0 0.0
      %587 = vmatpush1.msra.mxu0 0.0
      %588 = vmatprep.subr.mxu0 0.0
      %589 = vmatpush1.msra.mxu0 0.0
      %590 = vmatprep.subr.mxu0 0.0
      %591 = vmatpush1.msra.mxu0 0.0
      %592 = vmatprep.subr.mxu0 0.0
      %593 = vmatpush1.msra.mxu0 0.0
      %594 = vmatprep.subr.mxu0 0.0
      %595 = vmatpush1.msra.mxu0 0.0
      %596 = vmatprep.subr.mxu0 0.0
      %597 = vmatpush1.msra.mxu0 0.0
      %598 = vmatprep.subr.mxu0 0.0
      %599 = vmatpush1.msra.mxu0 0.0
      %600 = vmatprep.subr.mxu0 0.0
      %601 = vmatpush1.msra.mxu0 0.0
      %602 = vmatprep.subr.mxu0 0.0
      %603 = vmatpush1.msra.mxu0 0.0
      %604 = vmatprep.subr.mxu0 0.0
      %605 = vmatpush1.msra.mxu0 0.0
      %606 = vmatprep.subr.mxu0 0.0
      %607 = vmatpush1.msra.mxu0 0.0
      %608 = vmatprep.subr.mxu0 0.0
      %609 = vmatpush1.msra.mxu0 0.0
      %610 = vmatprep.subr.mxu0 0.0
      %611 = vmatpush1.msra.mxu0 0.0
      %612 = vmatprep.subr.mxu0 0.0
      %613 = vmatpush1.msra.mxu0 0.0
      %614 = vmatprep.subr.mxu0 0.0
      %615 = vmatpush1.msra.mxu0 0.0
      %616 = vmatprep.subr.mxu0 0.0
      %617 = vmatpush1.msra.mxu0 0.0
      %618 = vmatprep.subr.mxu0 0.0
      %619 = vmatpush1.msra.mxu0 0.0
      %620 = vmatprep.subr.mxu0 0.0
      %621 = vmatpush1.msra.mxu0 0.0
      %622 = vmatprep.subr.mxu0 0.0
      %623 = vmatpush1.msra.mxu0 0.0
      %624 = vmatprep.mubr.f32.mxu0 0.0
      %625 = vmatmul.mubr.f32.gmra.mrb[0].mxu0 %v555
      %v626 = vpop.f32.mrb[0].mxu0
      %v627 = vadd.f32 0.0, %v626
      %v628 = vpop.f32.mrb[0].mxu0
      %v629 = vadd.f32 0.0, %v628
      %630 = vmatprep.mubr.f32.mxu0 0.0
      %631 = vmatmul.mubr.f32.gmra.mrb[0].mxu0 %v558
      %v632 = vpop.f32.mrb[0].mxu0
      %v633 = vadd.f32 0.0, %v632
      %v634 = vpop.f32.mrb[0].mxu0
      %v635 = vadd.f32 0.0, %v634
      %636 = vdwg.mxu0
      %637 = vmatprep.subr.mxu0 0.0
      %638 = vmatpush1.msra.mxu0 %v536
      %639 = vmatprep.subr.mxu0 0.0
      %640 = vmatpush1.msra.mxu0 %v542
      %641 = vmatprep.subr.mxu0 0.0
      %642 = vmatpush1.msra.mxu0 0.0
      %643 = vmatprep.subr.mxu0 0.0
      %644 = vmatpush1.msra.mxu0 0.0
      %645 = vmatprep.subr.mxu0 0.0
      %646 = vmatpush1.msra.mxu0 0.0
      %647 = vmatprep.subr.mxu0 0.0
      %648 = vmatpush1.msra.mxu0 0.0
      %649 = vmatprep.subr.mxu0 0.0
      %650 = vmatpush1.msra.mxu0 0.0
      %651 = vmatprep.subr.mxu0 0.0
      %652 = vmatpush1.msra.mxu0 0.0
      %653 = vmatprep.subr.mxu0 0.0
      %654 = vmatpush1.msra.mxu0 0.0
      %655 = vmatprep.subr.mxu0 0.0
      %656 = vmatpush1.msra.mxu0 0.0
      %657 = vmatprep.subr.mxu0 0.0
      %658 = vmatpush1.msra.mxu0 0.0
      %659 = vmatprep.subr.mxu0 0.0
      %660 = vmatpush1.msra.mxu0 0.0
      %661 = vmatprep.subr.mxu0 0.0
      %662 = vmatpush1.msra.mxu0 0.0
      %663 = vmatprep.subr.mxu0 0.0
      %664 = vmatpush1.msra.mxu0 0.0
      %665 = vmatprep.subr.mxu0 0.0
      %666 = vmatpush1.msra.mxu0 0.0
      %667 = vmatprep.subr.mxu0 0.0
      %668 = vmatpush1.msra.mxu0 0.0
      %669 = vmatprep.subr.mxu0 0.0
      %670 = vmatpush1.msra.mxu0 0.0
      %671 = vmatprep.subr.mxu0 0.0
      %672 = vmatpush1.msra.mxu0 0.0
      %673 = vmatprep.subr.mxu0 0.0
      %674 = vmatpush1.msra.mxu0 0.0
      %675 = vmatprep.subr.mxu0 0.0
      %676 = vmatpush1.msra.mxu0 0.0
      %677 = vmatprep.subr.mxu0 0.0
      %678 = vmatpush1.msra.mxu0 0.0
      %679 = vmatprep.subr.mxu0 0.0
      %680 = vmatpush1.msra.mxu0 0.0
      %681 = vmatprep.subr.mxu0 0.0
      %682 = vmatpush1.msra.mxu0 0.0
      %683 = vmatprep.subr.mxu0 0.0
      %684 = vmatpush1.msra.mxu0 0.0
      %685 = vmatprep.subr.mxu0 0.0
      %686 = vmatpush1.msra.mxu0 0.0
      %687 = vmatprep.subr.mxu0 0.0
      %688 = vmatpush1.msra.mxu0 0.0
      %689 = vmatprep.subr.mxu0 0.0
      %690 = vmatpush1.msra.mxu0 0.0
      %691 = vmatprep.subr.mxu0 0.0
      %692 = vmatpush1.msra.mxu0 0.0
      %693 = vmatprep.subr.mxu0 0.0
      %694 = vmatpush1.msra.mxu0 0.0
      %695 = vmatprep.subr.mxu0 0.0
      %696 = vmatpush1.msra.mxu0 0.0
      %697 = vmatprep.subr.mxu0 0.0
      %698 = vmatpush1.msra.mxu0 0.0
      %699 = vmatprep.subr.mxu0 0.0
      %700 = vmatpush1.msra.mxu0 0.0
      %701 = vmatprep.mubr.f32.mxu0 0.0
      %702 = vmatmul.mubr.f32.gmra.mrb[0].mxu0 %v555
      %v703 = vpop.f32.mrb[0].mxu0
      %v704 = vadd.f32 0.0, %v703
      %v705 = vpop.f32.mrb[0].mxu0
      %706 = vmatprep.mubr.f32.mxu0 0.0
      %707 = vmatmul.mubr.f32.gmra.mrb[0].mxu0 %v558
      %v708 = vpop.f32.mrb[0].mxu0
      %v709 = vadd.f32 0.0, %v708
      %v710 = vpop.f32.mrb[0].mxu0
      %711 = vdwg.mxu0
      %v712 = vadd.f32 %v443, %v627
      %v713 = vadd.f32 %v445, %v629
      %v714 = vadd.f32 %v520, %v704
      %v715 = vadd.f32 %v449, %v633
      %v716 = vadd.f32 %v451, %v635
      %v717 = vadd.f32 %v525, %v709
      %s718 = scalar_lea.vmem %s1, 48
      %v719 = vld [vmem:[%s718] sm:$0xff]
      %v720 = vld [vmem:[%s718 + $0x8] sm:$0xff]
      %721 = vrot.lane.b32.xlu0 %v171, 110
      %v722 = vpop.permute.xlu0 %721
      %723 = vrot.lane.b32.xlu0 %v172, 110
      %v724 = vpop.permute.xlu0 %723
      %725 = vrot.lane.b32.xlu0 %v173, 110
      %v726 = vpop.permute.xlu0 %725
      %727 = vrot.lane.b32.xlu0 %v174, 110
      %v728 = vpop.permute.xlu0 %727
      %729 = vrot.lane.b32.xlu0 %v175, 110
      %v730 = vpop.permute.xlu0 %729
      %731 = vrot.lane.b32.xlu0 %v176, 110
      %v732 = vpop.permute.xlu0 %731
      %vm733 = vcmask 900096
      %v734 = vsel %vm733, %v722, %v724
      %v735 = vsel %vm733, %v724, %v726
      %v736 = vsel %vm733, %v728, %v730
      %v737 = vsel %vm733, %v730, %v732
      %v745 = vsel %vm211, %v719, 0
      %v748 = vsel %vm211, %v720, 0
      %750 = vmatprep.subr.mxu0 %v735
      %751 = vmatpush1.msra.mxu0 %v734
      %752 = vmatprep.subr.mxu0 %v737
      %753 = vmatpush1.msra.mxu0 %v736
      %754 = vmatprep.subr.mxu0 0.0
      %755 = vmatpush1.msra.mxu0 0.0
      %756 = vmatprep.subr.mxu0 0.0
      %757 = vmatpush1.msra.mxu0 0.0
      %758 = vmatprep.subr.mxu0 0.0
      %759 = vmatpush1.msra.mxu0 0.0
      %760 = vmatprep.subr.mxu0 0.0
      %761 = vmatpush1.msra.mxu0 0.0
      %762 = vmatprep.subr.mxu0 0.0
      %763 = vmatpush1.msra.mxu0 0.0
      %764 = vmatprep.subr.mxu0 0.0
      %765 = vmatpush1.msra.mxu0 0.0
      %766 = vmatprep.subr.mxu0 0.0
      %767 = vmatpush1.msra.mxu0 0.0
      %768 = vmatprep.subr.mxu0 0.0
      %769 = vmatpush1.msra.mxu0 0.0
      %770 = vmatprep.subr.mxu0 0.0
      %771 = vmatpush1.msra.mxu0 0.0
      %772 = vmatprep.subr.mxu0 0.0
      %773 = vmatpush1.msra.mxu0 0.0
      %774 = vmatprep.subr.mxu0 0.0
      %775 = vmatpush1.msra.mxu0 0.0
      %776 = vmatprep.subr.mxu0 0.0
      %777 = vmatpush1.msra.mxu0 0.0
      %778 = vmatprep.subr.mxu0 0.0
      %779 = vmatpush1.msra.mxu0 0.0
      %780 = vmatprep.subr.mxu0 0.0
      %781 = vmatpush1.msra.mxu0 0.0
      %782 = vmatprep.subr.mxu0 0.0
      %783 = vmatpush1.msra.mxu0 0.0
      %784 = vmatprep.subr.mxu0 0.0
      %785 = vmatpush1.msra.mxu0 0.0
      %786 = vmatprep.subr.mxu0 0.0
      %787 = vmatpush1.msra.mxu0 0.0
      %788 = vmatprep.subr.mxu0 0.0
      %789 = vmatpush1.msra.mxu0 0.0
      %790 = vmatprep.subr.mxu0 0.0
      %791 = vmatpush1.msra.mxu0 0.0
      %792 = vmatprep.subr.mxu0 0.0
      %793 = vmatpush1.msra.mxu0 0.0
      %794 = vmatprep.subr.mxu0 0.0
      %795 = vmatpush1.msra.mxu0 0.0
      %796 = vmatprep.subr.mxu0 0.0
      %797 = vmatpush1.msra.mxu0 0.0
      %798 = vmatprep.subr.mxu0 0.0
      %799 = vmatpush1.msra.mxu0 0.0
      %800 = vmatprep.subr.mxu0 0.0
      %801 = vmatpush1.msra.mxu0 0.0
      %802 = vmatprep.subr.mxu0 0.0
      %803 = vmatpush1.msra.mxu0 0.0
      %804 = vmatprep.subr.mxu0 0.0
      %805 = vmatpush1.msra.mxu0 0.0
      %806 = vmatprep.subr.mxu0 0.0
      %807 = vmatpush1.msra.mxu0 0.0
      %808 = vmatprep.subr.mxu0 0.0
      %809 = vmatpush1.msra.mxu0 0.0
      %810 = vmatprep.subr.mxu0 0.0
      %811 = vmatpush1.msra.mxu0 0.0
      %812 = vmatprep.subr.mxu0 0.0
      %813 = vmatpush1.msra.mxu0 0.0
      %814 = vmatprep.mubr.f32.mxu0 0.0
      %815 = vmatmul.mubr.f32.gmra.mrb[0].mxu0 %v745
      %v816 = vpop.f32.mrb[0].mxu0
      %v817 = vadd.f32 0.0, %v816
      %v818 = vpop.f32.mrb[0].mxu0
      %v819 = vadd.f32 0.0, %v818
      %820 = vmatprep.mubr.f32.mxu0 0.0
      %821 = vmatmul.mubr.f32.gmra.mrb[0].mxu0 %v748
      %v822 = vpop.f32.mrb[0].mxu0
      %v823 = vadd.f32 0.0, %v822
      %v824 = vpop.f32.mrb[0].mxu0
      %v825 = vadd.f32 0.0, %v824
      %826 = vdwg.mxu0
      %827 = vmatprep.subr.mxu0 0.0
      %828 = vmatpush1.msra.mxu0 %v726
      %829 = vmatprep.subr.mxu0 0.0
      %830 = vmatpush1.msra.mxu0 %v732
      %831 = vmatprep.subr.mxu0 0.0
      %832 = vmatpush1.msra.mxu0 0.0
      %833 = vmatprep.subr.mxu0 0.0
      %834 = vmatpush1.msra.mxu0 0.0
      %835 = vmatprep.subr.mxu0 0.0
      %836 = vmatpush1.msra.mxu0 0.0
      %837 = vmatprep.subr.mxu0 0.0
      %838 = vmatpush1.msra.mxu0 0.0
      %839 = vmatprep.subr.mxu0 0.0
      %840 = vmatpush1.msra.mxu0 0.0
      %841 = vmatprep.subr.mxu0 0.0
      %842 = vmatpush1.msra.mxu0 0.0
      %843 = vmatprep.subr.mxu0 0.0
      %844 = vmatpush1.msra.mxu0 0.0
      %845 = vmatprep.subr.mxu0 0.0
      %846 = vmatpush1.msra.mxu0 0.0
      %847 = vmatprep.subr.mxu0 0.0
      %848 = vmatpush1.msra.mxu0 0.0
      %849 = vmatprep.subr.mxu0 0.0
      %850 = vmatpush1.msra.mxu0 0.0
      %851 = vmatprep.subr.mxu0 0.0
      %852 = vmatpush1.msra.mxu0 0.0
      %853 = vmatprep.subr.mxu0 0.0
      %854 = vmatpush1.msra.mxu0 0.0
      %855 = vmatprep.subr.mxu0 0.0
      %856 = vmatpush1.msra.mxu0 0.0
      %857 = vmatprep.subr.mxu0 0.0
      %858 = vmatpush1.msra.mxu0 0.0
      %859 = vmatprep.subr.mxu0 0.0
      %860 = vmatpush1.msra.mxu0 0.0
      %861 = vmatprep.subr.mxu0 0.0
      %862 = vmatpush1.msra.mxu0 0.0
      %863 = vmatprep.subr.mxu0 0.0
      %864 = vmatpush1.msra.mxu0 0.0
      %865 = vmatprep.subr.mxu0 0.0
      %866 = vmatpush1.msra.mxu0 0.0
      %867 = vmatprep.subr.mxu0 0.0
      %868 = vmatpush1.msra.mxu0 0.0
      %869 = vmatprep.subr.mxu0 0.0
      %870 = vmatpush1.msra.mxu0 0.0
      %871 = vmatprep.subr.mxu0 0.0
      %872 = vmatpush1.msra.mxu0 0.0
      %873 = vmatprep.subr.mxu0 0.0
      %874 = vmatpush1.msra.mxu0 0.0
      %875 = vmatprep.subr.mxu0 0.0
      %876 = vmatpush1.msra.mxu0 0.0
      %877 = vmatprep.subr.mxu0 0.0
      %878 = vmatpush1.msra.mxu0 0.0
      %879 = vmatprep.subr.mxu0 0.0
      %880 = vmatpush1.msra.mxu0 0.0
      %881 = vmatprep.subr.mxu0 0.0
      %882 = vmatpush1.msra.mxu0 0.0
      %883 = vmatprep.subr.mxu0 0.0
      %884 = vmatpush1.msra.mxu0 0.0
      %885 = vmatprep.subr.mxu0 0.0
      %886 = vmatpush1.msra.mxu0 0.0
      %887 = vmatprep.subr.mxu0 0.0
      %888 = vmatpush1.msra.mxu0 0.0
      %889 = vmatprep.subr.mxu0 0.0
      %890 = vmatpush1.msra.mxu0 0.0
      %891 = vmatprep.mubr.f32.mxu0 0.0
      %892 = vmatmul.mubr.f32.gmra.mrb[0].mxu0 %v745
      %v893 = vpop.f32.mrb[0].mxu0
      %v894 = vadd.f32 0.0, %v893
      %v895 = vpop.f32.mrb[0].mxu0
      %896 = vmatprep.mubr.f32.mxu0 0.0
      %897 = vmatmul.mubr.f32.gmra.mrb[0].mxu0 %v748
      %v898 = vpop.f32.mrb[0].mxu0
      %v899 = vadd.f32 0.0, %v898
      %v900 = vpop.f32.mrb[0].mxu0
      %901 = vdwg.mxu0
      %v902 = vadd.f32 %v712, %v817
      %v903 = vadd.f32 %v713, %v819
      %v904 = vadd.f32 %v714, %v894
      %v905 = vadd.f32 %v715, %v823
      %v906 = vadd.f32 %v716, %v825
      %v907 = vadd.f32 %v717, %v899
      %s908 = scalar_lea.vmem %s1, 64
      %v909 = vld [vmem:[%s908] sm:$0xff]
      %v910 = vld [vmem:[%s908 + $0x8] sm:$0xff]
      %911 = vrot.lane.b32.xlu0 %v171, 109
      %v912 = vpop.permute.xlu0 %911
      %913 = vrot.lane.b32.xlu0 %v172, 109
      %v914 = vpop.permute.xlu0 %913
      %915 = vrot.lane.b32.xlu0 %v173, 109
      %v916 = vpop.permute.xlu0 %915
      %917 = vrot.lane.b32.xlu0 %v174, 109
      %v918 = vpop.permute.xlu0 %917
      %919 = vrot.lane.b32.xlu0 %v175, 109
      %v920 = vpop.permute.xlu0 %919
      %921 = vrot.lane.b32.xlu0 %v176, 109
      %v922 = vpop.permute.xlu0 %921
      %vm923 = vcmask 891904
      %v924 = vsel %vm923, %v912, %v914
      %v925 = vsel %vm923, %v914, %v916
      %v926 = vsel %vm923, %v918, %v920
      %v927 = vsel %vm923, %v920, %v922
      %v935 = vsel %vm211, %v909, 0
      %v938 = vsel %vm211, %v910, 0
      %940 = vmatprep.subr.mxu0 %v925
      %941 = vmatpush1.msra.mxu0 %v924
      %942 = vmatprep.subr.mxu0 %v927
      %943 = vmatpush1.msra.mxu0 %v926
      %944 = vmatprep.subr.mxu0 0.0
      %945 = vmatpush1.msra.mxu0 0.0
      %946 = vmatprep.subr.mxu0 0.0
      %947 = vmatpush1.msra.mxu0 0.0
      %948 = vmatprep.subr.mxu0 0.0
      %949 = vmatpush1.msra.mxu0 0.0
      %950 = vmatprep.subr.mxu0 0.0
      %951 = vmatpush1.msra.mxu0 0.0
      %952 = vmatprep.subr.mxu0 0.0
      %953 = vmatpush1.msra.mxu0 0.0
      %954 = vmatprep.subr.mxu0 0.0
      %955 = vmatpush1.msra.mxu0 0.0
      %956 = vmatprep.subr.mxu0 0.0
      %957 = vmatpush1.msra.mxu0 0.0
      %958 = vmatprep.subr.mxu0 0.0
      %959 = vmatpush1.msra.mxu0 0.0
      %960 = vmatprep.subr.mxu0 0.0
      %961 = vmatpush1.msra.mxu0 0.0
      %962 = vmatprep.subr.mxu0 0.0
      %963 = vmatpush1.msra.mxu0 0.0
      %964 = vmatprep.subr.mxu0 0.0
      %965 = vmatpush1.msra.mxu0 0.0
      %966 = vmatprep.subr.mxu0 0.0
      %967 = vmatpush1.msra.mxu0 0.0
      %968 = vmatprep.subr.mxu0 0.0
      %969 = vmatpush1.msra.mxu0 0.0
      %970 = vmatprep.subr.mxu0 0.0
      %971 = vmatpush1.msra.mxu0 0.0
      %972 = vmatprep.subr.mxu0 0.0
      %973 = vmatpush1.msra.mxu0 0.0
      %974 = vmatprep.subr.mxu0 0.0
      %975 = vmatpush1.msra.mxu0 0.0
      %976 = vmatprep.subr.mxu0 0.0
      %977 = vmatpush1.msra.mxu0 0.0
      %978 = vmatprep.subr.mxu0 0.0
      %979 = vmatpush1.msra.mxu0 0.0
      %980 = vmatprep.subr.mxu0 0.0
      %981 = vmatpush1.msra.mxu0 0.0
      %982 = vmatprep.subr.mxu0 0.0
      %983 = vmatpush1.msra.mxu0 0.0
      %984 = vmatprep.subr.mxu0 0.0
      %985 = vmatpush1.msra.mxu0 0.0
      %986 = vmatprep.subr.mxu0 0.0
      %987 = vmatpush1.msra.mxu0 0.0
      %988 = vmatprep.subr.mxu0 0.0
      %989 = vmatpush1.msra.mxu0 0.0
      %990 = vmatprep.subr.mxu0 0.0
      %991 = vmatpush1.msra.mxu0 0.0
      %992 = vmatprep.subr.mxu0 0.0
      %993 = vmatpush1.msra.mxu0 0.0
      %994 = vmatprep.subr.mxu0 0.0
      %995 = vmatpush1.msra.mxu0 0.0
      %996 = vmatprep.subr.mxu0 0.0
      %997 = vmatpush1.msra.mxu0 0.0
      %998 = vmatprep.subr.mxu0 0.0
      %999 = vmatpush1.msra.mxu0 0.0
      %1000 = vmatprep.subr.mxu0 0.0
      %1001 = vmatpush1.msra.mxu0 0.0
      %1002 = vmatprep.subr.mxu0 0.0
      %1003 = vmatpush1.msra.mxu0 0.0
      %1004 = vmatprep.mubr.f32.mxu0 0.0
      %1005 = vmatmul.mubr.f32.gmra.mrb[0].mxu0 %v935
      %v1006 = vpop.f32.mrb[0].mxu0
      %v1007 = vadd.f32 0.0, %v1006
      %v1008 = vpop.f32.mrb[0].mxu0
      %v1009 = vadd.f32 0.0, %v1008
      %1010 = vmatprep.mubr.f32.mxu0 0.0
      %1011 = vmatmul.mubr.f32.gmra.mrb[0].mxu0 %v938
      %v1012 = vpop.f32.mrb[0].mxu0
      %v1013 = vadd.f32 0.0, %v1012
      %v1014 = vpop.f32.mrb[0].mxu0
      %v1015 = vadd.f32 0.0, %v1014
      %1016 = vdwg.mxu0
      %1017 = vmatprep.subr.mxu0 0.0
      %1018 = vmatpush1.msra.mxu0 %v916
      %1019 = vmatprep.subr.mxu0 0.0
      %1020 = vmatpush1.msra.mxu0 %v922
      %1021 = vmatprep.subr.mxu0 0.0
      %1022 = vmatpush1.msra.mxu0 0.0
      %1023 = vmatprep.subr.mxu0 0.0
      %1024 = vmatpush1.msra.mxu0 0.0
      %1025 = vmatprep.subr.mxu0 0.0
      %1026 = vmatpush1.msra.mxu0 0.0
      %1027 = vmatprep.subr.mxu0 0.0
      %1028 = vmatpush1.msra.mxu0 0.0
      %1029 = vmatprep.subr.mxu0 0.0
      %1030 = vmatpush1.msra.mxu0 0.0
      %1031 = vmatprep.subr.mxu0 0.0
      %1032 = vmatpush1.msra.mxu0 0.0
      %1033 = vmatprep.subr.mxu0 0.0
      %1034 = vmatpush1.msra.mxu0 0.0
      %1035 = vmatprep.subr.mxu0 0.0
      %1036 = vmatpush1.msra.mxu0 0.0
      %1037 = vmatprep.subr.mxu0 0.0
      %1038 = vmatpush1.msra.mxu0 0.0
      %1039 = vmatprep.subr.mxu0 0.0
      %1040 = vmatpush1.msra.mxu0 0.0
      %1041 = vmatprep.subr.mxu0 0.0
      %1042 = vmatpush1.msra.mxu0 0.0
      %1043 = vmatprep.subr.mxu0 0.0
      %1044 = vmatpush1.msra.mxu0 0.0
      %1045 = vmatprep.subr.mxu0 0.0
      %1046 = vmatpush1.msra.mxu0 0.0
      %1047 = vmatprep.subr.mxu0 0.0
      %1048 = vmatpush1.msra.mxu0 0.0
      %1049 = vmatprep.subr.mxu0 0.0
      %1050 = vmatpush1.msra.mxu0 0.0
      %1051 = vmatprep.subr.mxu0 0.0
      %1052 = vmatpush1.msra.mxu0 0.0
      %1053 = vmatprep.subr.mxu0 0.0
      %1054 = vmatpush1.msra.mxu0 0.0
      %1055 = vmatprep.subr.mxu0 0.0
      %1056 = vmatpush1.msra.mxu0 0.0
      %1057 = vmatprep.subr.mxu0 0.0
      %1058 = vmatpush1.msra.mxu0 0.0
      %1059 = vmatprep.subr.mxu0 0.0
      %1060 = vmatpush1.msra.mxu0 0.0
      %1061 = vmatprep.subr.mxu0 0.0
      %1062 = vmatpush1.msra.mxu0 0.0
      %1063 = vmatprep.subr.mxu0 0.0
      %1064 = vmatpush1.msra.mxu0 0.0
      %1065 = vmatprep.subr.mxu0 0.0
      %1066 = vmatpush1.msra.mxu0 0.0
      %1067 = vmatprep.subr.mxu0 0.0
      %1068 = vmatpush1.msra.mxu0 0.0
      %1069 = vmatprep.subr.mxu0 0.0
      %1070 = vmatpush1.msra.mxu0 0.0
      %1071 = vmatprep.subr.mxu0 0.0
      %1072 = vmatpush1.msra.mxu0 0.0
      %1073 = vmatprep.subr.mxu0 0.0
      %1074 = vmatpush1.msra.mxu0 0.0
      %1075 = vmatprep.subr.mxu0 0.0
      %1076 = vmatpush1.msra.mxu0 0.0
      %1077 = vmatprep.subr.mxu0 0.0
      %1078 = vmatpush1.msra.mxu0 0.0
      %1079 = vmatprep.subr.mxu0 0.0
      %1080 = vmatpush1.msra.mxu0 0.0
      %1081 = vmatprep.mubr.f32.mxu0 0.0
      %1082 = vmatmul.mubr.f32.gmra.mrb[0].mxu0 %v935
      %v1083 = vpop.f32.mrb[0].mxu0
      %v1084 = vadd.f32 0.0, %v1083
      %v1085 = vpop.f32.mrb[0].mxu0
      %1086 = vmatprep.mubr.f32.mxu0 0.0
      %1087 = vmatmul.mubr.f32.gmra.mrb[0].mxu0 %v938
      %v1088 = vpop.f32.mrb[0].mxu0
      %v1089 = vadd.f32 0.0, %v1088
      %v1090 = vpop.f32.mrb[0].mxu0
      %1091 = vdwg.mxu0
      %v1092 = vadd.f32 %v902, %v1007
      %v1093 = vadd.f32 %v903, %v1009
      %v1094 = vadd.f32 %v904, %v1084
      %v1095 = vadd.f32 %v905, %v1013
      %v1096 = vadd.f32 %v906, %v1015
      %v1097 = vadd.f32 %v907, %v1089
      %s1098 = scalar_lea.vmem %s1, 80
      %v1099 = vld [vmem:[%s1098] sm:$0xff]
      %v1100 = vld [vmem:[%s1098 + $0x8] sm:$0xff]
      %1101 = vrot.lane.b32.xlu0 %v171, 108
      %v1102 = vpop.permute.xlu0 %1101
      %1103 = vrot.lane.b32.xlu0 %v172, 108
      %v1104 = vpop.permute.xlu0 %1103
      %1105 = vrot.lane.b32.xlu0 %v173, 108
      %v1106 = vpop.permute.xlu0 %1105
      %1107 = vrot.lane.b32.xlu0 %v174, 108
      %v1108 = vpop.permute.xlu0 %1107
      %1109 = vrot.lane.b32.xlu0 %v175, 108
      %v1110 = vpop.permute.xlu0 %1109
      %1111 = vrot.lane.b32.xlu0 %v176, 108
      %v1112 = vpop.permute.xlu0 %1111
      %vm1113 = vcmask 883712
      %v1114 = vsel %vm1113, %v1102, %v1104
      %v1115 = vsel %vm1113, %v1104, %v1106
      %v1116 = vsel %vm1113, %v1108, %v1110
      %v1117 = vsel %vm1113, %v1110, %v1112
      %v1125 = vsel %vm211, %v1099, 0
      %v1128 = vsel %vm211, %v1100, 0
      %1130 = vmatprep.subr.mxu0 %v1115
      %1131 = vmatpush1.msra.mxu0 %v1114
      %1132 = vmatprep.subr.mxu0 %v1117
      %1133 = vmatpush1.msra.mxu0 %v1116
      %1134 = vmatprep.subr.mxu0 0.0
      %1135 = vmatpush1.msra.mxu0 0.0
      %1136 = vmatprep.subr.mxu0 0.0
      %1137 = vmatpush1.msra.mxu0 0.0
      %1138 = vmatprep.subr.mxu0 0.0
      %1139 = vmatpush1.msra.mxu0 0.0
      %1140 = vmatprep.subr.mxu0 0.0
      %1141 = vmatpush1.msra.mxu0 0.0
      %1142 = vmatprep.subr.mxu0 0.0
      %1143 = vmatpush1.msra.mxu0 0.0
      %1144 = vmatprep.subr.mxu0 0.0
      %1145 = vmatpush1.msra.mxu0 0.0
      %1146 = vmatprep.subr.mxu0 0.0
      %1147 = vmatpush1.msra.mxu0 0.0
      %1148 = vmatprep.subr.mxu0 0.0
      %1149 = vmatpush1.msra.mxu0 0.0
      %1150 = vmatprep.subr.mxu0 0.0
      %1151 = vmatpush1.msra.mxu0 0.0
      %1152 = vmatprep.subr.mxu0 0.0
      %1153 = vmatpush1.msra.mxu0 0.0
      %1154 = vmatprep.subr.mxu0 0.0
      %1155 = vmatpush1.msra.mxu0 0.0
      %1156 = vmatprep.subr.mxu0 0.0
      %1157 = vmatpush1.msra.mxu0 0.0
      %1158 = vmatprep.subr.mxu0 0.0
      %1159 = vmatpush1.msra.mxu0 0.0
      %1160 = vmatprep.subr.mxu0 0.0
      %1161 = vmatpush1.msra.mxu0 0.0
      %1162 = vmatprep.subr.mxu0 0.0
      %1163 = vmatpush1.msra.mxu0 0.0
      %1164 = vmatprep.subr.mxu0 0.0
      %1165 = vmatpush1.msra.mxu0 0.0
      %1166 = vmatprep.subr.mxu0 0.0
      %1167 = vmatpush1.msra.mxu0 0.0
      %1168 = vmatprep.subr.mxu0 0.0
      %1169 = vmatpush1.msra.mxu0 0.0
      %1170 = vmatprep.subr.mxu0 0.0
      %1171 = vmatpush1.msra.mxu0 0.0
      %1172 = vmatprep.subr.mxu0 0.0
      %1173 = vmatpush1.msra.mxu0 0.0
      %1174 = vmatprep.subr.mxu0 0.0
      %1175 = vmatpush1.msra.mxu0 0.0
      %1176 = vmatprep.subr.mxu0 0.0
      %1177 = vmatpush1.msra.mxu0 0.0
      %1178 = vmatprep.subr.mxu0 0.0
      %1179 = vmatpush1.msra.mxu0 0.0
      %1180 = vmatprep.subr.mxu0 0.0
      %1181 = vmatpush1.msra.mxu0 0.0
      %1182 = vmatprep.subr.mxu0 0.0
      %1183 = vmatpush1.msra.mxu0 0.0
      %1184 = vmatprep.subr.mxu0 0.0
      %1185 = vmatpush1.msra.mxu0 0.0
      %1186 = vmatprep.subr.mxu0 0.0
      %1187 = vmatpush1.msra.mxu0 0.0
      %1188 = vmatprep.subr.mxu0 0.0
      %1189 = vmatpush1.msra.mxu0 0.0
      %1190 = vmatprep.subr.mxu0 0.0
      %1191 = vmatpush1.msra.mxu0 0.0
      %1192 = vmatprep.subr.mxu0 0.0
      %1193 = vmatpush1.msra.mxu0 0.0
      %1194 = vmatprep.mubr.f32.mxu0 0.0
      %1195 = vmatmul.mubr.f32.gmra.mrb[0].mxu0 %v1125
      %v1196 = vpop.f32.mrb[0].mxu0
      %v1197 = vadd.f32 0.0, %v1196
      %v1198 = vpop.f32.mrb[0].mxu0
      %v1199 = vadd.f32 0.0, %v1198
      %1200 = vmatprep.mubr.f32.mxu0 0.0
      %1201 = vmatmul.mubr.f32.gmra.mrb[0].mxu0 %v1128
      %v1202 = vpop.f32.mrb[0].mxu0
      %v1203 = vadd.f32 0.0, %v1202
      %v1204 = vpop.f32.mrb[0].mxu0
      %v1205 = vadd.f32 0.0, %v1204
      %1206 = vdwg.mxu0
      %1207 = vmatprep.subr.mxu0 0.0
      %1208 = vmatpush1.msra.mxu0 %v1106
      %1209 = vmatprep.subr.mxu0 0.0
      %1210 = vmatpush1.msra.mxu0 %v1112
      %1211 = vmatprep.subr.mxu0 0.0
      %1212 = vmatpush1.msra.mxu0 0.0
      %1213 = vmatprep.subr.mxu0 0.0
      %1214 = vmatpush1.msra.mxu0 0.0
      %1215 = vmatprep.subr.mxu0 0.0
      %1216 = vmatpush1.msra.mxu0 0.0
      %1217 = vmatprep.subr.mxu0 0.0
      %1218 = vmatpush1.msra.mxu0 0.0
      %1219 = vmatprep.subr.mxu0 0.0
      %1220 = vmatpush1.msra.mxu0 0.0
      %1221 = vmatprep.subr.mxu0 0.0
      %1222 = vmatpush1.msra.mxu0 0.0
      %1223 = vmatprep.subr.mxu0 0.0
      %1224 = vmatpush1.msra.mxu0 0.0
      %1225 = vmatprep.subr.mxu0 0.0
      %1226 = vmatpush1.msra.mxu0 0.0
      %1227 = vmatprep.subr.mxu0 0.0
      %1228 = vmatpush1.msra.mxu0 0.0
      %1229 = vmatprep.subr.mxu0 0.0
      %1230 = vmatpush1.msra.mxu0 0.0
      %1231 = vmatprep.subr.mxu0 0.0
      %1232 = vmatpush1.msra.mxu0 0.0
      %1233 = vmatprep.subr.mxu0 0.0
      %1234 = vmatpush1.msra.mxu0 0.0
      %1235 = vmatprep.subr.mxu0 0.0
      %1236 = vmatpush1.msra.mxu0 0.0
      %1237 = vmatprep.subr.mxu0 0.0
      %1238 = vmatpush1.msra.mxu0 0.0
      %1239 = vmatprep.subr.mxu0 0.0
      %1240 = vmatpush1.msra.mxu0 0.0
      %1241 = vmatprep.subr.mxu0 0.0
      %1242 = vmatpush1.msra.mxu0 0.0
      %1243 = vmatprep.subr.mxu0 0.0
      %1244 = vmatpush1.msra.mxu0 0.0
      %1245 = vmatprep.subr.mxu0 0.0
      %1246 = vmatpush1.msra.mxu0 0.0
      %1247 = vmatprep.subr.mxu0 0.0
      %1248 = vmatpush1.msra.mxu0 0.0
      %1249 = vmatprep.subr.mxu0 0.0
      %1250 = vmatpush1.msra.mxu0 0.0
      %1251 = vmatprep.subr.mxu0 0.0
      %1252 = vmatpush1.msra.mxu0 0.0
      %1253 = vmatprep.subr.mxu0 0.0
      %1254 = vmatpush1.msra.mxu0 0.0
      %1255 = vmatprep.subr.mxu0 0.0
      %1256 = vmatpush1.msra.mxu0 0.0
      %1257 = vmatprep.subr.mxu0 0.0
      %1258 = vmatpush1.msra.mxu0 0.0
      %1259 = vmatprep.subr.mxu0 0.0
      %1260 = vmatpush1.msra.mxu0 0.0
      %1261 = vmatprep.subr.mxu0 0.0
      %1262 = vmatpush1.msra.mxu0 0.0
      %1263 = vmatprep.subr.mxu0 0.0
      %1264 = vmatpush1.msra.mxu0 0.0
      %1265 = vmatprep.subr.mxu0 0.0
      %1266 = vmatpush1.msra.mxu0 0.0
      %1267 = vmatprep.subr.mxu0 0.0
      %1268 = vmatpush1.msra.mxu0 0.0
      %1269 = vmatprep.subr.mxu0 0.0
      %1270 = vmatpush1.msra.mxu0 0.0
      %1271 = vmatprep.mubr.f32.mxu0 0.0
      %1272 = vmatmul.mubr.f32.gmra.mrb[0].mxu0 %v1125
      %v1273 = vpop.f32.mrb[0].mxu0
      %v1274 = vadd.f32 0.0, %v1273
      %v1275 = vpop.f32.mrb[0].mxu0
      %1276 = vmatprep.mubr.f32.mxu0 0.0
      %1277 = vmatmul.mubr.f32.gmra.mrb[0].mxu0 %v1128
      %v1278 = vpop.f32.mrb[0].mxu0
      %v1279 = vadd.f32 0.0, %v1278
      %v1280 = vpop.f32.mrb[0].mxu0
      %1281 = vdwg.mxu0
      %v1282 = vadd.f32 %v1092, %v1197
      %v1283 = vadd.f32 %v1093, %v1199
      %v1284 = vadd.f32 %v1094, %v1274
      %v1285 = vadd.f32 %v1095, %v1203
      %v1286 = vadd.f32 %v1096, %v1205
      %v1287 = vadd.f32 %v1097, %v1279
      %s1288 = scalar_lea.vmem %s1, 96
      %v1289 = vld [vmem:[%s1288] sm:$0xff]
      %v1290 = vld [vmem:[%s1288 + $0x8] sm:$0xff]
      %1291 = vrot.lane.b32.xlu0 %v171, 92
      %v1292 = vpop.permute.xlu0 %1291
      %1293 = vrot.lane.b32.xlu0 %v172, 92
      %v1294 = vpop.permute.xlu0 %1293
      %1295 = vrot.lane.b32.xlu0 %v173, 92
      %v1296 = vpop.permute.xlu0 %1295
      %1297 = vrot.lane.b32.xlu0 %v174, 92
      %v1298 = vpop.permute.xlu0 %1297
      %1299 = vrot.lane.b32.xlu0 %v175, 92
      %v1300 = vpop.permute.xlu0 %1299
      %1301 = vrot.lane.b32.xlu0 %v176, 92
      %v1302 = vpop.permute.xlu0 %1301
      %vm1303 = vcmask 752640
      %v1304 = vsel %vm1303, %v1292, %v1294
      %v1305 = vsel %vm1303, %v1294, %v1296
      %v1306 = vsel %vm1303, %v1298, %v1300
      %v1307 = vsel %vm1303, %v1300, %v1302
      %v1315 = vsel %vm211, %v1289, 0
      %v1318 = vsel %vm211, %v1290, 0
      %1320 = vmatprep.subr.mxu0 %v1305
      %1321 = vmatpush1.msra.mxu0 %v1304
      %1322 = vmatprep.subr.mxu0 %v1307
      %1323 = vmatpush1.msra.mxu0 %v1306
      %1324 = vmatprep.subr.mxu0 0.0
      %1325 = vmatpush1.msra.mxu0 0.0
      %1326 = vmatprep.subr.mxu0 0.0
      %1327 = vmatpush1.msra.mxu0 0.0
      %1328 = vmatprep.subr.mxu0 0.0
      %1329 = vmatpush1.msra.mxu0 0.0
      %1330 = vmatprep.subr.mxu0 0.0
      %1331 = vmatpush1.msra.mxu0 0.0
      %1332 = vmatprep.subr.mxu0 0.0
      %1333 = vmatpush1.msra.mxu0 0.0
      %1334 = vmatprep.subr.mxu0 0.0
      %1335 = vmatpush1.msra.mxu0 0.0
      %1336 = vmatprep.subr.mxu0 0.0
      %1337 = vmatpush1.msra.mxu0 0.0
      %1338 = vmatprep.subr.mxu0 0.0
      %1339 = vmatpush1.msra.mxu0 0.0
      %1340 = vmatprep.subr.mxu0 0.0
      %1341 = vmatpush1.msra.mxu0 0.0
      %1342 = vmatprep.subr.mxu0 0.0
      %1343 = vmatpush1.msra.mxu0 0.0
      %1344 = vmatprep.subr.mxu0 0.0
      %1345 = vmatpush1.msra.mxu0 0.0
      %1346 = vmatprep.subr.mxu0 0.0
      %1347 = vmatpush1.msra.mxu0 0.0
      %1348 = vmatprep.subr.mxu0 0.0
      %1349 = vmatpush1.msra.mxu0 0.0
      %1350 = vmatprep.subr.mxu0 0.0
      %1351 = vmatpush1.msra.mxu0 0.0
      %1352 = vmatprep.subr.mxu0 0.0
      %1353 = vmatpush1.msra.mxu0 0.0
      %1354 = vmatprep.subr.mxu0 0.0
      %1355 = vmatpush1.msra.mxu0 0.0
      %1356 = vmatprep.subr.mxu0 0.0
      %1357 = vmatpush1.msra.mxu0 0.0
      %1358 = vmatprep.subr.mxu0 0.0
      %1359 = vmatpush1.msra.mxu0 0.0
      %1360 = vmatprep.subr.mxu0 0.0
      %1361 = vmatpush1.msra.mxu0 0.0
      %1362 = vmatprep.subr.mxu0 0.0
      %1363 = vmatpush1.msra.mxu0 0.0
      %1364 = vmatprep.subr.mxu0 0.0
      %1365 = vmatpush1.msra.mxu0 0.0
      %1366 = vmatprep.subr.mxu0 0.0
      %1367 = vmatpush1.msra.mxu0 0.0
      %1368 = vmatprep.subr.mxu0 0.0
      %1369 = vmatpush1.msra.mxu0 0.0
      %1370 = vmatprep.subr.mxu0 0.0
      %1371 = vmatpush1.msra.mxu0 0.0
      %1372 = vmatprep.subr.mxu0 0.0
      %1373 = vmatpush1.msra.mxu0 0.0
      %1374 = vmatprep.subr.mxu0 0.0
      %1375 = vmatpush1.msra.mxu0 0.0
      %1376 = vmatprep.subr.mxu0 0.0
      %1377 = vmatpush1.msra.mxu0 0.0
      %1378 = vmatprep.subr.mxu0 0.0
      %1379 = vmatpush1.msra.mxu0 0.0
      %1380 = vmatprep.subr.mxu0 0.0
      %1381 = vmatpush1.msra.mxu0 0.0
      %1382 = vmatprep.subr.mxu0 0.0
      %1383 = vmatpush1.msra.mxu0 0.0
      %1384 = vmatprep.mubr.f32.mxu0 0.0
      %1385 = vmatmul.mubr.f32.gmra.mrb[0].mxu0 %v1315
      %v1386 = vpop.f32.mrb[0].mxu0
      %v1387 = vadd.f32 0.0, %v1386
      %v1388 = vpop.f32.mrb[0].mxu0
      %v1389 = vadd.f32 0.0, %v1388
      %1390 = vmatprep.mubr.f32.mxu0 0.0
      %1391 = vmatmul.mubr.f32.gmra.mrb[0].mxu0 %v1318
      %v1392 = vpop.f32.mrb[0].mxu0
      %v1393 = vadd.f32 0.0, %v1392
      %v1394 = vpop.f32.mrb[0].mxu0
      %v1395 = vadd.f32 0.0, %v1394
      %1396 = vdwg.mxu0
      %1397 = vmatprep.subr.mxu0 0.0
      %1398 = vmatpush1.msra.mxu0 %v1296
      %1399 = vmatprep.subr.mxu0 0.0
      %1400 = vmatpush1.msra.mxu0 %v1302
      %1401 = vmatprep.subr.mxu0 0.0
      %1402 = vmatpush1.msra.mxu0 0.0
      %1403 = vmatprep.subr.mxu0 0.0
      %1404 = vmatpush1.msra.mxu0 0.0
      %1405 = vmatprep.subr.mxu0 0.0
      %1406 = vmatpush1.msra.mxu0 0.0
      %1407 = vmatprep.subr.mxu0 0.0
      %1408 = vmatpush1.msra.mxu0 0.0
      %1409 = vmatprep.subr.mxu0 0.0
      %1410 = vmatpush1.msra.mxu0 0.0
      %1411 = vmatprep.subr.mxu0 0.0
      %1412 = vmatpush1.msra.mxu0 0.0
      %1413 = vmatprep.subr.mxu0 0.0
      %1414 = vmatpush1.msra.mxu0 0.0
      %1415 = vmatprep.subr.mxu0 0.0
      %1416 = vmatpush1.msra.mxu0 0.0
      %1417 = vmatprep.subr.mxu0 0.0
      %1418 = vmatpush1.msra.mxu0 0.0
      %1419 = vmatprep.subr.mxu0 0.0
      %1420 = vmatpush1.msra.mxu0 0.0
      %1421 = vmatprep.subr.mxu0 0.0
      %1422 = vmatpush1.msra.mxu0 0.0
      %1423 = vmatprep.subr.mxu0 0.0
      %1424 = vmatpush1.msra.mxu0 0.0
      %1425 = vmatprep.subr.mxu0 0.0
      %1426 = vmatpush1.msra.mxu0 0.0
      %1427 = vmatprep.subr.mxu0 0.0
      %1428 = vmatpush1.msra.mxu0 0.0
      %1429 = vmatprep.subr.mxu0 0.0
      %1430 = vmatpush1.msra.mxu0 0.0
      %1431 = vmatprep.subr.mxu0 0.0
      %1432 = vmatpush1.msra.mxu0 0.0
      %1433 = vmatprep.subr.mxu0 0.0
      %1434 = vmatpush1.msra.mxu0 0.0
      %1435 = vmatprep.subr.mxu0 0.0
      %1436 = vmatpush1.msra.mxu0 0.0
      %1437 = vmatprep.subr.mxu0 0.0
      %1438 = vmatpush1.msra.mxu0 0.0
      %1439 = vmatprep.subr.mxu0 0.0
      %1440 = vmatpush1.msra.mxu0 0.0
      %1441 = vmatprep.subr.mxu0 0.0
      %1442 = vmatpush1.msra.mxu0 0.0
      %1443 = vmatprep.subr.mxu0 0.0
      %1444 = vmatpush1.msra.mxu0 0.0
      %1445 = vmatprep.subr.mxu0 0.0
      %1446 = vmatpush1.msra.mxu0 0.0
      %1447 = vmatprep.subr.mxu0 0.0
      %1448 = vmatpush1.msra.mxu0 0.0
      %1449 = vmatprep.subr.mxu0 0.0
      %1450 = vmatpush1.msra.mxu0 0.0
      %1451 = vmatprep.subr.mxu0 0.0
      %1452 = vmatpush1.msra.mxu0 0.0
      %1453 = vmatprep.subr.mxu0 0.0
      %1454 = vmatpush1.msra.mxu0 0.0
      %1455 = vmatprep.subr.mxu0 0.0
      %1456 = vmatpush1.msra.mxu0 0.0
      %1457 = vmatprep.subr.mxu0 0.0
      %1458 = vmatpush1.msra.mxu0 0.0
      %1459 = vmatprep.subr.mxu0 0.0
      %1460 = vmatpush1.msra.mxu0 0.0
      %1461 = vmatprep.mubr.f32.mxu0 0.0
      %1462 = vmatmul.mubr.f32.gmra.mrb[0].mxu0 %v1315
      %v1463 = vpop.f32.mrb[0].mxu0
      %v1464 = vadd.f32 0.0, %v1463
      %v1465 = vpop.f32.mrb[0].mxu0
      %1466 = vmatprep.mubr.f32.mxu0 0.0
      %1467 = vmatmul.mubr.f32.gmra.mrb[0].mxu0 %v1318
      %v1468 = vpop.f32.mrb[0].mxu0
      %v1469 = vadd.f32 0.0, %v1468
      %v1470 = vpop.f32.mrb[0].mxu0
      %1471 = vdwg.mxu0
      %v1472 = vadd.f32 %v1282, %v1387
      %v1473 = vadd.f32 %v1283, %v1389
      %v1474 = vadd.f32 %v1284, %v1464
      %v1475 = vadd.f32 %v1285, %v1393
      %v1476 = vadd.f32 %v1286, %v1395
      %v1477 = vadd.f32 %v1287, %v1469
      %s1478 = scalar_lea.vmem %s1, 112
      %v1479 = vld [vmem:[%s1478] sm:$0xff]
      %v1480 = vld [vmem:[%s1478 + $0x8] sm:$0xff]
      %1481 = vrot.lane.b32.xlu0 %v171, 91
      %v1482 = vpop.permute.xlu0 %1481
      %1483 = vrot.lane.b32.xlu0 %v172, 91
      %v1484 = vpop.permute.xlu0 %1483
      %1485 = vrot.lane.b32.xlu0 %v173, 91
      %v1486 = vpop.permute.xlu0 %1485
      %1487 = vrot.lane.b32.xlu0 %v174, 91
      %v1488 = vpop.permute.xlu0 %1487
      %1489 = vrot.lane.b32.xlu0 %v175, 91
      %v1490 = vpop.permute.xlu0 %1489
      %1491 = vrot.lane.b32.xlu0 %v176, 91
      %v1492 = vpop.permute.xlu0 %1491
      %vm1493 = vcmask 744448
      %v1494 = vsel %vm1493, %v1482, %v1484
      %v1495 = vsel %vm1493, %v1484, %v1486
      %v1496 = vsel %vm1493, %v1488, %v1490
      %v1497 = vsel %vm1493, %v1490, %v1492
      %v1505 = vsel %vm211, %v1479, 0
      %v1508 = vsel %vm211, %v1480, 0
      %1510 = vmatprep.subr.mxu0 %v1495
      %1511 = vmatpush1.msra.mxu0 %v1494
      %1512 = vmatprep.subr.mxu0 %v1497
      %1513 = vmatpush1.msra.mxu0 %v1496
      %1514 = vmatprep.subr.mxu0 0.0
      %1515 = vmatpush1.msra.mxu0 0.0
      %1516 = vmatprep.subr.mxu0 0.0
      %1517 = vmatpush1.msra.mxu0 0.0
      %1518 = vmatprep.subr.mxu0 0.0
      %1519 = vmatpush1.msra.mxu0 0.0
      %1520 = vmatprep.subr.mxu0 0.0
      %1521 = vmatpush1.msra.mxu0 0.0
      %1522 = vmatprep.subr.mxu0 0.0
      %1523 = vmatpush1.msra.mxu0 0.0
      %1524 = vmatprep.subr.mxu0 0.0
      %1525 = vmatpush1.msra.mxu0 0.0
      %1526 = vmatprep.subr.mxu0 0.0
      %1527 = vmatpush1.msra.mxu0 0.0
      %1528 = vmatprep.subr.mxu0 0.0
      %1529 = vmatpush1.msra.mxu0 0.0
      %1530 = vmatprep.subr.mxu0 0.0
      %1531 = vmatpush1.msra.mxu0 0.0
      %1532 = vmatprep.subr.mxu0 0.0
      %1533 = vmatpush1.msra.mxu0 0.0
      %1534 = vmatprep.subr.mxu0 0.0
      %1535 = vmatpush1.msra.mxu0 0.0
      %1536 = vmatprep.subr.mxu0 0.0
      %1537 = vmatpush1.msra.mxu0 0.0
      %1538 = vmatprep.subr.mxu0 0.0
      %1539 = vmatpush1.msra.mxu0 0.0
      %1540 = vmatprep.subr.mxu0 0.0
      %1541 = vmatpush1.msra.mxu0 0.0
      %1542 = vmatprep.subr.mxu0 0.0
      %1543 = vmatpush1.msra.mxu0 0.0
      %1544 = vmatprep.subr.mxu0 0.0
      %1545 = vmatpush1.msra.mxu0 0.0
      %1546 = vmatprep.subr.mxu0 0.0
      %1547 = vmatpush1.msra.mxu0 0.0
      %1548 = vmatprep.subr.mxu0 0.0
      %1549 = vmatpush1.msra.mxu0 0.0
      %1550 = vmatprep.subr.mxu0 0.0
      %1551 = vmatpush1.msra.mxu0 0.0
      %1552 = vmatprep.subr.mxu0 0.0
      %1553 = vmatpush1.msra.mxu0 0.0
      %1554 = vmatprep.subr.mxu0 0.0
      %1555 = vmatpush1.msra.mxu0 0.0
      %1556 = vmatprep.subr.mxu0 0.0
      %1557 = vmatpush1.msra.mxu0 0.0
      %1558 = vmatprep.subr.mxu0 0.0
      %1559 = vmatpush1.msra.mxu0 0.0
      %1560 = vmatprep.subr.mxu0 0.0
      %1561 = vmatpush1.msra.mxu0 0.0
      %1562 = vmatprep.subr.mxu0 0.0
      %1563 = vmatpush1.msra.mxu0 0.0
      %1564 = vmatprep.subr.mxu0 0.0
      %1565 = vmatpush1.msra.mxu0 0.0
      %1566 = vmatprep.subr.mxu0 0.0
      %1567 = vmatpush1.msra.mxu0 0.0
      %1568 = vmatprep.subr.mxu0 0.0
      %1569 = vmatpush1.msra.mxu0 0.0
      %1570 = vmatprep.subr.mxu0 0.0
      %1571 = vmatpush1.msra.mxu0 0.0
      %1572 = vmatprep.subr.mxu0 0.0
      %1573 = vmatpush1.msra.mxu0 0.0
      %1574 = vmatprep.mubr.f32.mxu0 0.0
      %1575 = vmatmul.mubr.f32.gmra.mrb[0].mxu0 %v1505
      %v1576 = vpop.f32.mrb[0].mxu0
      %v1577 = vadd.f32 0.0, %v1576
      %v1578 = vpop.f32.mrb[0].mxu0
      %v1579 = vadd.f32 0.0, %v1578
      %1580 = vmatprep.mubr.f32.mxu0 0.0
      %1581 = vmatmul.mubr.f32.gmra.mrb[0].mxu0 %v1508
      %v1582 = vpop.f32.mrb[0].mxu0
      %v1583 = vadd.f32 0.0, %v1582
      %v1584 = vpop.f32.mrb[0].mxu0
      %v1585 = vadd.f32 0.0, %v1584
      %1586 = vdwg.mxu0
      %1587 = vmatprep.subr.mxu0 0.0
      %1588 = vmatpush1.msra.mxu0 %v1486
      %1589 = vmatprep.subr.mxu0 0.0
      %1590 = vmatpush1.msra.mxu0 %v1492
      %1591 = vmatprep.subr.mxu0 0.0
      %1592 = vmatpush1.msra.mxu0 0.0
      %1593 = vmatprep.subr.mxu0 0.0
      %1594 = vmatpush1.msra.mxu0 0.0
      %1595 = vmatprep.subr.mxu0 0.0
      %1596 = vmatpush1.msra.mxu0 0.0
      %1597 = vmatprep.subr.mxu0 0.0
      %1598 = vmatpush1.msra.mxu0 0.0
      %1599 = vmatprep.subr.mxu0 0.0
      %1600 = vmatpush1.msra.mxu0 0.0
      %1601 = vmatprep.subr.mxu0 0.0
      %1602 = vmatpush1.msra.mxu0 0.0
      %1603 = vmatprep.subr.mxu0 0.0
      %1604 = vmatpush1.msra.mxu0 0.0
      %1605 = vmatprep.subr.mxu0 0.0
      %1606 = vmatpush1.msra.mxu0 0.0
      %1607 = vmatprep.subr.mxu0 0.0
      %1608 = vmatpush1.msra.mxu0 0.0
      %1609 = vmatprep.subr.mxu0 0.0
      %1610 = vmatpush1.msra.mxu0 0.0
      %1611 = vmatprep.subr.mxu0 0.0
      %1612 = vmatpush1.msra.mxu0 0.0
      %1613 = vmatprep.subr.mxu0 0.0
      %1614 = vmatpush1.msra.mxu0 0.0
      %1615 = vmatprep.subr.mxu0 0.0
      %1616 = vmatpush1.msra.mxu0 0.0
      %1617 = vmatprep.subr.mxu0 0.0
      %1618 = vmatpush1.msra.mxu0 0.0
      %1619 = vmatprep.subr.mxu0 0.0
      %1620 = vmatpush1.msra.mxu0 0.0
      %1621 = vmatprep.subr.mxu0 0.0
      %1622 = vmatpush1.msra.mxu0 0.0
      %1623 = vmatprep.subr.mxu0 0.0
      %1624 = vmatpush1.msra.mxu0 0.0
      %1625 = vmatprep.subr.mxu0 0.0
      %1626 = vmatpush1.msra.mxu0 0.0
      %1627 = vmatprep.subr.mxu0 0.0
      %1628 = vmatpush1.msra.mxu0 0.0
      %1629 = vmatprep.subr.mxu0 0.0
      %1630 = vmatpush1.msra.mxu0 0.0
      %1631 = vmatprep.subr.mxu0 0.0
      %1632 = vmatpush1.msra.mxu0 0.0
      %1633 = vmatprep.subr.mxu0 0.0
      %1634 = vmatpush1.msra.mxu0 0.0
      %1635 = vmatprep.subr.mxu0 0.0
      %1636 = vmatpush1.msra.mxu0 0.0
      %1637 = vmatprep.subr.mxu0 0.0
      %1638 = vmatpush1.msra.mxu0 0.0
      %1639 = vmatprep.subr.mxu0 0.0
      %1640 = vmatpush1.msra.mxu0 0.0
      %1641 = vmatprep.subr.mxu0 0.0
      %1642 = vmatpush1.msra.mxu0 0.0
      %1643 = vmatprep.subr.mxu0 0.0
      %1644 = vmatpush1.msra.mxu0 0.0
      %1645 = vmatprep.subr.mxu0 0.0
      %1646 = vmatpush1.msra.mxu0 0.0
      %1647 = vmatprep.subr.mxu0 0.0
      %1648 = vmatpush1.msra.mxu0 0.0
      %1649 = vmatprep.subr.mxu0 0.0
      %1650 = vmatpush1.msra.mxu0 0.0
      %1651 = vmatprep.mubr.f32.mxu0 0.0
      %1652 = vmatmul.mubr.f32.gmra.mrb[0].mxu0 %v1505
      %v1653 = vpop.f32.mrb[0].mxu0
      %v1654 = vadd.f32 0.0, %v1653
      %v1655 = vpop.f32.mrb[0].mxu0
      %1656 = vmatprep.mubr.f32.mxu0 0.0
      %1657 = vmatmul.mubr.f32.gmra.mrb[0].mxu0 %v1508
      %v1658 = vpop.f32.mrb[0].mxu0
      %v1659 = vadd.f32 0.0, %v1658
      %v1660 = vpop.f32.mrb[0].mxu0
      %1661 = vdwg.mxu0
      %v1662 = vadd.f32 %v1472, %v1577
      %v1663 = vadd.f32 %v1473, %v1579
      %v1664 = vadd.f32 %v1474, %v1654
      %v1665 = vadd.f32 %v1475, %v1583
      %v1666 = vadd.f32 %v1476, %v1585
      %v1667 = vadd.f32 %v1477, %v1659
      %s1668 = scalar_lea.vmem %s1, 128
      %v1669 = vld [vmem:[%s1668] sm:$0xff]
      %v1670 = vld [vmem:[%s1668 + $0x8] sm:$0xff]
      %1671 = vrot.lane.b32.xlu0 %v171, 90
      %v1672 = vpop.permute.xlu0 %1671
      %1673 = vrot.lane.b32.xlu0 %v172, 90
      %v1674 = vpop.permute.xlu0 %1673
      %1675 = vrot.lane.b32.xlu0 %v173, 90
      %v1676 = vpop.permute.xlu0 %1675
      %1677 = vrot.lane.b32.xlu0 %v174, 90
      %v1678 = vpop.permute.xlu0 %1677
      %1679 = vrot.lane.b32.xlu0 %v175, 90
      %v1680 = vpop.permute.xlu0 %1679
      %1681 = vrot.lane.b32.xlu0 %v176, 90
      %v1682 = vpop.permute.xlu0 %1681
      %vm1683 = vcmask 736256
      %v1684 = vsel %vm1683, %v1672, %v1674
      %v1685 = vsel %vm1683, %v1674, %v1676
      %v1686 = vsel %vm1683, %v1678, %v1680
      %v1687 = vsel %vm1683, %v1680, %v1682
      %v1695 = vsel %vm211, %v1669, 0
      %v1698 = vsel %vm211, %v1670, 0
      %1700 = vmatprep.subr.mxu0 %v1685
      %1701 = vmatpush1.msra.mxu0 %v1684
      %1702 = vmatprep.subr.mxu0 %v1687
      %1703 = vmatpush1.msra.mxu0 %v1686
      %1704 = vmatprep.subr.mxu0 0.0
      %1705 = vmatpush1.msra.mxu0 0.0
      %1706 = vmatprep.subr.mxu0 0.0
      %1707 = vmatpush1.msra.mxu0 0.0
      %1708 = vmatprep.subr.mxu0 0.0
      %1709 = vmatpush1.msra.mxu0 0.0
      %1710 = vmatprep.subr.mxu0 0.0
      %1711 = vmatpush1.msra.mxu0 0.0
      %1712 = vmatprep.subr.mxu0 0.0
      %1713 = vmatpush1.msra.mxu0 0.0
      %1714 = vmatprep.subr.mxu0 0.0
      %1715 = vmatpush1.msra.mxu0 0.0
      %1716 = vmatprep.subr.mxu0 0.0
      %1717 = vmatpush1.msra.mxu0 0.0
      %1718 = vmatprep.subr.mxu0 0.0
      %1719 = vmatpush1.msra.mxu0 0.0
      %1720 = vmatprep.subr.mxu0 0.0
      %1721 = vmatpush1.msra.mxu0 0.0
      %1722 = vmatprep.subr.mxu0 0.0
      %1723 = vmatpush1.msra.mxu0 0.0
      %1724 = vmatprep.subr.mxu0 0.0
      %1725 = vmatpush1.msra.mxu0 0.0
      %1726 = vmatprep.subr.mxu0 0.0
      %1727 = vmatpush1.msra.mxu0 0.0
      %1728 = vmatprep.subr.mxu0 0.0
      %1729 = vmatpush1.msra.mxu0 0.0
      %1730 = vmatprep.subr.mxu0 0.0
      %1731 = vmatpush1.msra.mxu0 0.0
      %1732 = vmatprep.subr.mxu0 0.0
      %1733 = vmatpush1.msra.mxu0 0.0
      %1734 = vmatprep.subr.mxu0 0.0
      %1735 = vmatpush1.msra.mxu0 0.0
      %1736 = vmatprep.subr.mxu0 0.0
      %1737 = vmatpush1.msra.mxu0 0.0
      %1738 = vmatprep.subr.mxu0 0.0
      %1739 = vmatpush1.msra.mxu0 0.0
      %1740 = vmatprep.subr.mxu0 0.0
      %1741 = vmatpush1.msra.mxu0 0.0
      %1742 = vmatprep.subr.mxu0 0.0
      %1743 = vmatpush1.msra.mxu0 0.0
      %1744 = vmatprep.subr.mxu0 0.0
      %1745 = vmatpush1.msra.mxu0 0.0
      %1746 = vmatprep.subr.mxu0 0.0
      %1747 = vmatpush1.msra.mxu0 0.0
      %1748 = vmatprep.subr.mxu0 0.0
      %1749 = vmatpush1.msra.mxu0 0.0
      %1750 = vmatprep.subr.mxu0 0.0
      %1751 = vmatpush1.msra.mxu0 0.0
      %1752 = vmatprep.subr.mxu0 0.0
      %1753 = vmatpush1.msra.mxu0 0.0
      %1754 = vmatprep.subr.mxu0 0.0
      %1755 = vmatpush1.msra.mxu0 0.0
      %1756 = vmatprep.subr.mxu0 0.0
      %1757 = vmatpush1.msra.mxu0 0.0
      %1758 = vmatprep.subr.mxu0 0.0
      %1759 = vmatpush1.msra.mxu0 0.0
      %1760 = vmatprep.subr.mxu0 0.0
      %1761 = vmatpush1.msra.mxu0 0.0
      %1762 = vmatprep.subr.mxu0 0.0
      %1763 = vmatpush1.msra.mxu0 0.0
      %1764 = vmatprep.mubr.f32.mxu0 0.0
      %1765 = vmatmul.mubr.f32.gmra.mrb[0].mxu0 %v1695
      %v1766 = vpop.f32.mrb[0].mxu0
      %v1767 = vadd.f32 0.0, %v1766
      %v1768 = vpop.f32.mrb[0].mxu0
      %v1769 = vadd.f32 0.0, %v1768
      %1770 = vmatprep.mubr.f32.mxu0 0.0
      %1771 = vmatmul.mubr.f32.gmra.mrb[0].mxu0 %v1698
      %v1772 = vpop.f32.mrb[0].mxu0
      %v1773 = vadd.f32 0.0, %v1772
      %v1774 = vpop.f32.mrb[0].mxu0
      %v1775 = vadd.f32 0.0, %v1774
      %1776 = vdwg.mxu0
      %1777 = vmatprep.subr.mxu0 0.0
      %1778 = vmatpush1.msra.mxu0 %v1676
      %1779 = vmatprep.subr.mxu0 0.0
      %1780 = vmatpush1.msra.mxu0 %v1682
      %1781 = vmatprep.subr.mxu0 0.0
      %1782 = vmatpush1.msra.mxu0 0.0
      %1783 = vmatprep.subr.mxu0 0.0
      %1784 = vmatpush1.msra.mxu0 0.0
      %1785 = vmatprep.subr.mxu0 0.0
      %1786 = vmatpush1.msra.mxu0 0.0
      %1787 = vmatprep.subr.mxu0 0.0
      %1788 = vmatpush1.msra.mxu0 0.0
      %1789 = vmatprep.subr.mxu0 0.0
      %1790 = vmatpush1.msra.mxu0 0.0
      %1791 = vmatprep.subr.mxu0 0.0
      %1792 = vmatpush1.msra.mxu0 0.0
      %1793 = vmatprep.subr.mxu0 0.0
      %1794 = vmatpush1.msra.mxu0 0.0
      %1795 = vmatprep.subr.mxu0 0.0
      %1796 = vmatpush1.msra.mxu0 0.0
      %1797 = vmatprep.subr.mxu0 0.0
      %1798 = vmatpush1.msra.mxu0 0.0
      %1799 = vmatprep.subr.mxu0 0.0
      %1800 = vmatpush1.msra.mxu0 0.0
      %1801 = vmatprep.subr.mxu0 0.0
      %1802 = vmatpush1.msra.mxu0 0.0
      %1803 = vmatprep.subr.mxu0 0.0
      %1804 = vmatpush1.msra.mxu0 0.0
      %1805 = vmatprep.subr.mxu0 0.0
      %1806 = vmatpush1.msra.mxu0 0.0
      %1807 = vmatprep.subr.mxu0 0.0
      %1808 = vmatpush1.msra.mxu0 0.0
      %1809 = vmatprep.subr.mxu0 0.0
      %1810 = vmatpush1.msra.mxu0 0.0
      %1811 = vmatprep.subr.mxu0 0.0
      %1812 = vmatpush1.msra.mxu0 0.0
      %1813 = vmatprep.subr.mxu0 0.0
      %1814 = vmatpush1.msra.mxu0 0.0
      %1815 = vmatprep.subr.mxu0 0.0
      %1816 = vmatpush1.msra.mxu0 0.0
      %1817 = vmatprep.subr.mxu0 0.0
      %1818 = vmatpush1.msra.mxu0 0.0
      %1819 = vmatprep.subr.mxu0 0.0
      %1820 = vmatpush1.msra.mxu0 0.0
      %1821 = vmatprep.subr.mxu0 0.0
      %1822 = vmatpush1.msra.mxu0 0.0
      %1823 = vmatprep.subr.mxu0 0.0
      %1824 = vmatpush1.msra.mxu0 0.0
      %1825 = vmatprep.subr.mxu0 0.0
      %1826 = vmatpush1.msra.mxu0 0.0
      %1827 = vmatprep.subr.mxu0 0.0
      %1828 = vmatpush1.msra.mxu0 0.0
      %1829 = vmatprep.subr.mxu0 0.0
      %1830 = vmatpush1.msra.mxu0 0.0
      %1831 = vmatprep.subr.mxu0 0.0
      %1832 = vmatpush1.msra.mxu0 0.0
      %1833 = vmatprep.subr.mxu0 0.0
      %1834 = vmatpush1.msra.mxu0 0.0
      %1835 = vmatprep.subr.mxu0 0.0
      %1836 = vmatpush1.msra.mxu0 0.0
      %1837 = vmatprep.subr.mxu0 0.0
      %1838 = vmatpush1.msra.mxu0 0.0
      %1839 = vmatprep.subr.mxu0 0.0
      %1840 = vmatpush1.msra.mxu0 0.0
      %1841 = vmatprep.mubr.f32.mxu0 0.0
      %1842 = vmatmul.mubr.f32.gmra.mrb[0].mxu0 %v1695
      %v1843 = vpop.f32.mrb[0].mxu0
      %v1844 = vadd.f32 0.0, %v1843
      %v1845 = vpop.f32.mrb[0].mxu0
      %1846 = vmatprep.mubr.f32.mxu0 0.0
      %1847 = vmatmul.mubr.f32.gmra.mrb[0].mxu0 %v1698
      %v1848 = vpop.f32.mrb[0].mxu0
      %v1849 = vadd.f32 0.0, %v1848
      %v1850 = vpop.f32.mrb[0].mxu0
      %1851 = vdwg.mxu0
      %v1852 = vadd.f32 %v1662, %v1767
      %v1853 = vadd.f32 %v1663, %v1769
      %v1854 = vadd.f32 %v1664, %v1844
      %v1855 = vadd.f32 %v1665, %v1773
      %v1856 = vadd.f32 %v1666, %v1775
      %v1857 = vadd.f32 %v1667, %v1849
      %v1858 = vld [vmem:[%s2] sm:$0xff]
      %v1859 = vld [vmem:[%s2 + $0x8] sm:$0xff]
      %1861 = vset.pattern.permute.xlu0 0
      %1862 = vperm.xlu0 %1861, %v1858
      %v1863 = vpop.permute.xlu0 %1862
      %1866 = vset.pattern.permute.xlu0 0
      %1867 = vperm.xlu0 %1866, %v1859
      %v1868 = vpop.permute.xlu0 %1867
      %v1870 = vadd.f32 %v1852, %v1863
      %v1871 = vadd.f32 %v1853, %v1863
      %v1872 = vadd.f32 %v1854, %v1863
      %v1873 = vadd.f32 %v1855, %v1868
      %v1874 = vadd.f32 %v1856, %v1868
      %v1875 = vadd.f32 %v1857, %v1868
      %1876 = vst [vmem:[%s170] sm:$0xff] %v1870
      %1877 = vst [vmem:[%s170 + $0x8] sm:$0xff] %v1871
      %vm1878 = vcmask 261120
      %1879 = vst.msk [vmem:[%s170 + $0x10] sm:$0xff] %vm1878, %v1872
      %1880 = vst [vmem:[%s170 + $0x18] sm:$0xff] %v1873
      %1881 = vst [vmem:[%s170 + $0x20] sm:$0xff] %v1874
      %1882 = vst.msk [vmem:[%s170 + $0x28] sm:$0xff] %vm1878, %v1875
      %p1883 = scmp.lt.s32.totalorder %s14, 1
      %s1884 = scalar_select %p1883, %s14, 1
      %s1885 = smul.addr %s1884, 6
      %s1886 = smul.addr %s1885, 8
      %s1887 = scalar_lea.vmem %s3, %s1886
      // Predicated region
      $region33: #{dgconv2d_forward.1} parent=31 // pred_check
        %p1888 = pneg %p100
      $region34: #{dgconv2d_forward.1} parent=31 // pred_check_branch
        %1890 = sbr.rel (%p1888) target = $region36
      $region35: #{dgconv2d_forward.1} parent=31 // pred_region
        _
      $region36: #{dgconv2d_forward.1} parent=31 // pred_fallthru
        _
    $region32: #{dgconv2d_forward.1} parent=5 // pred_fallthru
      _
    %p1891 = scmp.le.s32.totalorder 2, %s9
    // Predicated region
    $region37: #{dgconv2d_forward.1} parent=5 // pred_check
      %p1892 = pneg %p1891
    $region38: #{dgconv2d_forward.1} parent=5 // pred_check_branch
      %1894 = sbr.rel (%p1892) target = $region40
    $region39: #{dgconv2d_forward.1} parent=5 // pred_region
      %s1895 = ssub.s32 %s9, 2
      // Predicated region
      $region41: #{dgconv2d_forward.1} parent=39 // pred_check
        %p1896 = pneg %p106
      $region42: #{dgconv2d_forward.1} parent=39 // pred_check_branch
        %1898 = sbr.rel (%p1896) target = $region44
      $region43: #{dgconv2d_forward.1} parent=39 // pred_region
        %p1899 = scmp.lt.s32.totalorder %s15, 1
        %s1900 = scalar_select %p1899, %s15, 1
        %s1901 = smul.addr %s1900, 6
        %s1902 = smul.addr %s1901, 8
        %s1903 = scalar_lea.vmem %s3, %s1902
      $region44: #{dgconv2d_forward.1} parent=39 // pred_fallthru
        _
    $region40: #{dgconv2d_forward.1} parent=5 // pred_fallthru
      _
  $region6: #{dgconv2d_forward.1} parent=0 // loop_footer
    %s13 = sadd.s32 1, %s9
  $region7: #{dgconv2d_forward.1} parent=0 // loop_footer_branch
    %8 = sbr.rel target = $region3
  $region8: #{dgconv2d_forward.1} parent=0 // loop_exit
    _

</llo_original>
